<compile_context>
chip_gen: v7x
topology: tpu7x:2x2x1
jax: 0.10.0
libtpu: 0.0.40
codegen_flags: <defaults>
</compile_context>

<pallas_src>
import functools

import jax
import jax.numpy as jnp
import numpy as np
from jax import lax
from jax.experimental import pallas as pl
from jax.experimental.pallas import tpu as pltpu

SMOOTH = 1e-07


def _surface_dice_kernel(p_slab_ref, p_prev_ref, p_next_ref,
                         t_slab_ref, t_prev_ref, t_next_ref,
                         sums_ref, *, W):
    """One D-slab: sigmoid + surface extraction + partial Dice sums."""
    i = pl.program_id(0)
    n = pl.num_programs(0)
    S, HW = p_slab_ref.shape
    HB = p_prev_ref.shape[0]

    @pl.when(i == 0)
    def _init():
        sums_ref[...] = jnp.zeros_like(sums_ref)

    # torch pads with zeros AFTER the sigmoid, so out-of-volume neighbours
    # must contribute exactly 0 (never sigmoid(0) = 0.5).
    first_f = (i > 0).astype(jnp.float32)      # zero the d-1 halo on the first slab
    last_f = (i < n - 1).astype(jnp.float32)   # zero the d+1 halo on the last slab

    # Edge masks over the flattened (H*W) lane dim, shared by preds & targets.
    lane = lax.broadcasted_iota(jnp.int32, (1, HW), 1)
    w_idx = lane % W
    not_w_lo = (w_idx != 0).astype(jnp.float32)      # kills the w-1 neighbour at w == 0
    not_w_hi = (w_idx != W - 1).astype(jnp.float32)  # kills the w+1 neighbour at w == W-1
    not_h_lo = (lane >= W).astype(jnp.float32)       # kills the h-1 neighbour at h == 0
    not_h_hi = (lane < HW - W).astype(jnp.float32)   # kills the h+1 neighbour at h == H-1

    row = lax.broadcasted_iota(jnp.int32, (S, 1), 0)
    row_lo = row == 0
    row_hi = row == S - 1

    def surface(slab, prev_plane, next_plane):
        # slab: (S, H*W); prev/next_plane: (1, H*W) already zeroed at volume edges.
        # Central differences with zero fill; surface = any(diff != 0)
        # (identical to the sqrt-magnitude threshold of the reference).
        dw = (pltpu.roll(slab, HW - 1, axis=1) * not_w_hi     # x[.., w+1]
              - pltpu.roll(slab, 1, axis=1) * not_w_lo)       # x[.., w-1]
        dh = (pltpu.roll(slab, HW - W, axis=1) * not_h_hi     # x[.., h+1, :]
              - pltpu.roll(slab, W, axis=1) * not_h_lo)       # x[.., h-1, :]
        up_d = jnp.where(row_hi, next_plane, pltpu.roll(slab, S - 1, axis=0))
        dn_d = jnp.where(row_lo, prev_plane, pltpu.roll(slab, 1, axis=0))
        dd = up_d - dn_d
        return ((dw != 0.0) | (dh != 0.0) | (dd != 0.0)).astype(jnp.float32)

    p_surf = surface(jax.nn.sigmoid(p_slab_ref[...]),
                     jax.nn.sigmoid(p_prev_ref[HB - 1:HB, :]) * first_f,
                     jax.nn.sigmoid(p_next_ref[0:1, :]) * last_f)
    t_surf = surface(t_slab_ref[...],
                     t_prev_ref[HB - 1:HB, :] * first_f,
                     t_next_ref[0:1, :] * last_f)

    # Fused Dice reductions: row 0 accumulates sum(p*t), row 1 sum(p)+sum(t).
    inter = jnp.sum(p_surf * t_surf)
    denom = jnp.sum(p_surf + t_surf)
    acc_row = lax.broadcasted_iota(jnp.int32, sums_ref.shape, 0)
    sums_ref[...] = sums_ref[...] + jnp.where(acc_row == 0, inter, denom)


def _pick_slab(D, HW):
    """Pick (slab_planes, halo_planes) respecting the (8, 128) block rule."""
    if D % 8 != 0:
        return D, D                      # odd depth: single full-volume slab
    budget_planes = max(8, (1 << 20) // (HW * 4))   # ~1 MiB of f32 per input slab
    best, s = 8, 8
    while s <= D:
        if D % s == 0 and s <= budget_planes:
            best = s
        s += 8
    return best, 8


@functools.partial(jax.jit, static_argnames=("slab",))
def boundary_loss(preds, targets, slab=None):
    """BoundaryLoss.forward: 1 - surface-Dice(sigmoid(preds)[0,0], targets[0,0])."""
    p_vol = preds[0, 0].astype(jnp.float32)
    t_vol = targets[0, 0].astype(jnp.float32)
    D, H, W = p_vol.shape
    HW = H * W
    # Lane-dense 2-D view: W alone (e.g. 16) would waste most of the 128 lanes.
    p2 = p_vol.reshape(D, HW)
    t2 = t_vol.reshape(D, HW)

    if slab is None:
        S, HB = _pick_slab(D, HW)
    else:
        S = int(slab)
        if D % S != 0 or not (S % 8 == 0 or S == D):
            raise ValueError("slab must divide D and be a multiple of 8 (or == D)")
        HB = 8 if S % 8 == 0 else D
    n_halo_blocks = D // HB

    slab_map = lambda i: (i, 0)
    # Halo blocks: the HB-plane window containing plane i*S - 1 (resp. i*S + S),
    # clamped in range; out-of-volume halos are zeroed in-kernel (first_f/last_f).
    prev_map = lambda i: (jnp.maximum(i * (S // HB) - 1, 0), 0)
    next_map = lambda i: (jnp.minimum((i + 1) * (S // HB), n_halo_blocks - 1), 0)

    kernel = functools.partial(_surface_dice_kernel, W=W)
    sums = pl.pallas_call(
        kernel,
        out_shape=jax.ShapeDtypeStruct((2, 128), jnp.float32),
        grid=(D // S,),
        in_specs=[
            pl.BlockSpec((S, HW), slab_map),
            pl.BlockSpec((HB, HW), prev_map),
            pl.BlockSpec((HB, HW), next_map),
            pl.BlockSpec((S, HW), slab_map),
            pl.BlockSpec((HB, HW), prev_map),
            pl.BlockSpec((HB, HW), next_map),
        ],
        out_specs=pl.BlockSpec((2, 128), lambda i: (0, 0)),
        compiler_params=pltpu.CompilerParams(
            dimension_semantics=("arbitrary",),   # reduction axis (carried sums)
            vmem_limit_bytes=48 * 1024 * 1024,
        ),
    )(p2, p2, p2, t2, t2, t2)

    inter = sums[0, 0]
    denom = sums[1, 0]
    # torch.sum(1 - DiceCoeff) over a scalar == the scalar itself.
    return 1.0 - (2.0 * inter + SMOOTH) / (denom + SMOOTH)


def boundary_loss_ref(preds, targets):
    """Pure-JAX mirror of the PyTorch module, for correctness checking."""
    def surf(v):
        vp = jnp.pad(v, ((1, 1), (1, 1), (1, 1)))
        dz = vp[1:-1, 1:-1, 2:] - vp[1:-1, 1:-1, :-2]
        dy = vp[1:-1, 2:, 1:-1] - vp[1:-1, :-2, 1:-1]
        dx = vp[2:, 1:-1, 1:-1] - vp[:-2, 1:-1, 1:-1]
        mag = jnp.sqrt(dx ** 2 + dy ** 2 + dz ** 2)
        return jnp.where(mag > 0, 1.0, mag)

    p_set = surf(jax.nn.sigmoid(preds[0, 0].astype(jnp.float32)))
    t_set = surf(targets[0, 0].astype(jnp.float32))
    inter = jnp.sum(p_set * t_set)
    return 1.0 - (2.0 * inter + SMOOTH) / (jnp.sum(p_set) + jnp.sum(t_set) + SMOOTH)


if __name__ == "__main__":
    key = jax.random.PRNGKey(0)
    k1, k2 = jax.random.split(key)
    # NCDHW volumes: batch=2, channels=1, D=16, H=W=16 (only [0, 0] is used,
    # exactly as in the PyTorch module).
    preds = jax.random.normal(k1, (2, 1, 16, 16, 16), dtype=jnp.float32)
    targets = (jax.random.uniform(k2, (2, 1, 16, 16, 16)) > 0.5).astype(jnp.float32)

    # slab=8 -> 2-step grid: exercises the halo exchange + accumulator path.
    loss = boundary_loss(preds, targets, slab=8)
    jax.block_until_ready(loss)

    ref = boundary_loss_ref(preds, targets)
    np.testing.assert_allclose(np.asarray(loss), np.asarray(ref), rtol=1e-5, atol=1e-6)
    print("KERNEL_OK")
</pallas_src>

<mosaic_0001>
module attributes {stable_mosaic.version = 11 : i64} {
  func.func @_surface_dice_kernel(%arg0: i32, %arg1: memref<8x256xf32, #tpu.memory_space<vmem>>, %arg2: memref<8x256xf32, #tpu.memory_space<vmem>>, %arg3: memref<8x256xf32, #tpu.memory_space<vmem>>, %arg4: memref<8x256xf32, #tpu.memory_space<vmem>>, %arg5: memref<8x256xf32, #tpu.memory_space<vmem>>, %arg6: memref<8x256xf32, #tpu.memory_space<vmem>>, %arg7: memref<2x128xf32, #tpu.memory_space<vmem>>) attributes {dimension_semantics = [#tpu.dimension_semantics<arbitrary>], iteration_bounds = array<i64: 2>, scalar_prefetch = 0 : i64, scratch_operands = 0 : i64, tpu.core_type = #tpu.core_type<tc>, window_params = [{transform_indices = @transform_0, window_bounds = array<i64: 8, 256>}, {transform_indices = @transform_1, window_bounds = array<i64: 8, 256>}, {transform_indices = @transform_2, window_bounds = array<i64: 8, 256>}, {transform_indices = @transform_3, window_bounds = array<i64: 8, 256>}, {transform_indices = @transform_4, window_bounds = array<i64: 8, 256>}, {transform_indices = @transform_5, window_bounds = array<i64: 8, 256>}, {pipeline_mode = #tpu.pipeline_mode<synchronous>, transform_indices = @transform_6, window_bounds = array<i64: 2, 128>}]} {
    %c0_i32 = arith.constant 0 : i32
    %0 = arith.cmpi eq, %arg0, %c0_i32 : i32
    %1 = arith.extui %0 : i1 to i32
    %c0_i32_0 = arith.constant 0 : i32
    %2 = arith.cmpi ne, %1, %c0_i32_0 : i32
    scf.if %2 {
      %cst_46 = arith.constant 0.000000e+00 : f32
      %169 = vector.broadcast %cst_46 : f32 to vector<2x128xf32>
      %c0_47 = arith.constant 0 : index
      %c0_48 = arith.constant 0 : index
      %170 = vector.load %arg7[%c0_47, %c0_48] : memref<2x128xf32, #tpu.memory_space<vmem>>, vector<2x128xf32>
      tpu.vector_store %arg7[%c0_47, %c0_48], %169 {strides = array<i32>} : memref<2x128xf32, #tpu.memory_space<vmem>>, vector<2x128xf32>,
    } else {
    }
    %c0_i32_1 = arith.constant 0 : i32
    %3 = arith.cmpi sgt, %arg0, %c0_i32_1 : i32
    %4 = arith.extui %3 : i1 to i32
    %5 = arith.sitofp %4 : i32 to f32
    %c1_i32 = arith.constant 1 : i32
    %6 = arith.cmpi slt, %arg0, %c1_i32 : i32
    %7 = arith.extui %6 : i1 to i32
    %8 = arith.sitofp %7 : i32 to f32
    %9 = tpu.iota {dimensions = array<i32: 1>} : vector<1x256xi32>
    %c16_i32 = arith.constant 16 : i32
    %c0_i32_2 = arith.constant 0 : i32
    %10 = arith.cmpi eq, %c16_i32, %c0_i32_2 : i32
    %c1_i32_3 = arith.constant 1 : i32
    %11 = arith.select %10, %c1_i32_3, %c16_i32 : i32
    %12 = vector.broadcast %11 : i32 to vector<1x256xi32>
    %13 = arith.remsi %9, %12 : vector<1x256xi32>
    %c0_i32_4 = arith.constant 0 : i32
    %14 = vector.broadcast %c0_i32_4 : i32 to vector<1x256xi32>
    %15 = arith.cmpi ne, %13, %14 : vector<1x256xi32>
    %c0_i32_5 = arith.constant 0 : i32
    %16 = vector.broadcast %c0_i32_5 : i32 to vector<1x256xi32>
    %17 = arith.cmpi slt, %13, %16 : vector<1x256xi32>
    %c0_i32_6 = arith.constant 0 : i32
    %18 = arith.cmpi slt, %11, %c0_i32_6 : i32
    %19 = vector.broadcast %18 : i1 to vector<1x256xi1>
    %20 = vector.broadcast %19 : vector<1x256xi1> to vector<1x256xi1>
    %21 = arith.xori %17, %20 : vector<1x256xi1>
    %22 = arith.andi %21, %15 : vector<1x256xi1>
    %23 = vector.broadcast %11 : i32 to vector<1x256xi32>
    %24 = arith.addi %13, %23 : vector<1x256xi32>
    %25 = arith.select %22, %24, %13 : vector<1x256xi1>, vector<1x256xi32>
    %c0_i32_7 = arith.constant 0 : i32
    %26 = vector.broadcast %c0_i32_7 : i32 to vector<1x256xi32>
    %27 = arith.cmpi ne, %25, %26 : vector<1x256xi32>
    %28 = arith.extui %27 : vector<1x256xi1> to vector<1x256xi32>
    %29 = arith.sitofp %28 : vector<1x256xi32> to vector<1x256xf32>
    %c15_i32 = arith.constant 15 : i32
    %30 = vector.broadcast %c15_i32 : i32 to vector<1x256xi32>
    %31 = arith.cmpi ne, %25, %30 : vector<1x256xi32>
    %32 = arith.extui %31 : vector<1x256xi1> to vector<1x256xi32>
    %33 = arith.sitofp %32 : vector<1x256xi32> to vector<1x256xf32>
    %c16_i32_8 = arith.constant 16 : i32
    %34 = vector.broadcast %c16_i32_8 : i32 to vector<1x256xi32>
    %35 = arith.cmpi sge, %9, %34 : vector<1x256xi32>
    %36 = arith.extui %35 : vector<1x256xi1> to vector<1x256xi32>
    %37 = arith.sitofp %36 : vector<1x256xi32> to vector<1x256xf32>
    %c240_i32 = arith.constant 240 : i32
    %38 = vector.broadcast %c240_i32 : i32 to vector<1x256xi32>
    %39 = arith.cmpi slt, %9, %38 : vector<1x256xi32>
    %40 = arith.extui %39 : vector<1x256xi1> to vector<1x256xi32>
    %41 = arith.sitofp %40 : vector<1x256xi32> to vector<1x256xf32>
    %42 = tpu.iota {dimensions = array<i32: 0>} : vector<8x1xi32>
    %c0_i32_9 = arith.constant 0 : i32
    %43 = vector.broadcast %c0_i32_9 : i32 to vector<8x1xi32>
    %44 = arith.cmpi eq, %42, %43 : vector<8x1xi32>
    %c7_i32 = arith.constant 7 : i32
    %45 = vector.broadcast %c7_i32 : i32 to vector<8x1xi32>
    %46 = arith.cmpi eq, %42, %45 : vector<8x1xi32>
    %c0 = arith.constant 0 : index
    %c0_10 = arith.constant 0 : index
    %47 = vector.load %arg1[%c0, %c0_10] : memref<8x256xf32, #tpu.memory_space<vmem>>, vector<8x256xf32>
    %48 = arith.negf %47 : vector<8x256xf32>
    %49 = math.exp %48 : vector<8x256xf32>
    %cst = arith.constant 1.000000e+00 : f32
    %50 = vector.broadcast %cst : f32 to vector<8x256xf32>
    %51 = arith.addf %50, %49 : vector<8x256xf32>
    %52 = arith.divf %50, %51 : vector<8x256xf32>
    %c7 = arith.constant 7 : index
    %c0_11 = arith.constant 0 : index
    %53 = vector.load %arg2[%c7, %c0_11] : memref<8x256xf32, #tpu.memory_space<vmem>>, vector<1x256xf32>
    %54 = arith.negf %53 : vector<1x256xf32>
    %55 = math.exp %54 : vector<1x256xf32>
    %cst_12 = arith.constant 1.000000e+00 : f32
    %56 = vector.broadcast %cst_12 : f32 to vector<1x256xf32>
    %57 = arith.addf %56, %55 : vector<1x256xf32>
    %58 = arith.divf %56, %57 : vector<1x256xf32>
    %59 = vector.broadcast %5 : f32 to vector<1x256xf32>
    %60 = arith.mulf %58, %59 : vector<1x256xf32>
    %c0_13 = arith.constant 0 : index
    %c0_14 = arith.constant 0 : index
    %61 = vector.load %arg3[%c0_13, %c0_14] : memref<8x256xf32, #tpu.memory_space<vmem>>, vector<1x256xf32>
    %62 = arith.negf %61 : vector<1x256xf32>
    %63 = math.exp %62 : vector<1x256xf32>
    %cst_15 = arith.constant 1.000000e+00 : f32
    %64 = vector.broadcast %cst_15 : f32 to vector<1x256xf32>
    %65 = arith.addf %64, %63 : vector<1x256xf32>
    %66 = arith.divf %64, %65 : vector<1x256xf32>
    %67 = vector.broadcast %8 : f32 to vector<1x256xf32>
    %68 = arith.mulf %66, %67 : vector<1x256xf32>
    %c255_i32 = arith.constant 255 : i32
    %69 = tpu.dynamic_rotate %52 by %c255_i32 dim 1 : vector<8x256xf32>, i32 -> vector<8x256xf32>
    %70 = vector.broadcast %33 : vector<1x256xf32> to vector<8x256xf32>
    %71 = arith.mulf %69, %70 : vector<8x256xf32>
    %c1_i32_16 = arith.constant 1 : i32
    %72 = tpu.dynamic_rotate %52 by %c1_i32_16 dim 1 : vector<8x256xf32>, i32 -> vector<8x256xf32>
    %73 = vector.broadcast %29 : vector<1x256xf32> to vector<8x256xf32>
    %74 = arith.mulf %72, %73 : vector<8x256xf32>
    %75 = arith.subf %71, %74 : vector<8x256xf32>
    %c240_i32_17 = arith.constant 240 : i32
    %76 = tpu.dynamic_rotate %52 by %c240_i32_17 dim 1 : vector<8x256xf32>, i32 -> vector<8x256xf32>
    %77 = vector.broadcast %41 : vector<1x256xf32> to vector<8x256xf32>
    %78 = arith.mulf %76, %77 : vector<8x256xf32>
    %c16_i32_18 = arith.constant 16 : i32
    %79 = tpu.dynamic_rotate %52 by %c16_i32_18 dim 1 : vector<8x256xf32>, i32 -> vector<8x256xf32>
    %80 = vector.broadcast %37 : vector<1x256xf32> to vector<8x256xf32>
    %81 = arith.mulf %79, %80 : vector<8x256xf32>
    %82 = arith.subf %78, %81 : vector<8x256xf32>
    %c7_i32_19 = arith.constant 7 : i32
    %83 = tpu.dynamic_rotate %52 by %c7_i32_19 dim 0 : vector<8x256xf32>, i32 -> vector<8x256xf32>
    %84 = vector.shape_cast %46 : vector<8x1xi1> to vector<8x1xi1>
    %85 = vector.broadcast %84 : vector<8x1xi1> to vector<8x256xi1>
    %86 = vector.shape_cast %68 : vector<1x256xf32> to vector<1x256xf32>
    %87 = vector.broadcast %86 : vector<1x256xf32> to vector<8x256xf32>
    %88 = arith.select %85, %87, %83 : vector<8x256xi1>, vector<8x256xf32>
    %c1_i32_20 = arith.constant 1 : i32
    %89 = tpu.dynamic_rotate %52 by %c1_i32_20 dim 0 : vector<8x256xf32>, i32 -> vector<8x256xf32>
    %90 = vector.shape_cast %44 : vector<8x1xi1> to vector<8x1xi1>
    %91 = vector.broadcast %90 : vector<8x1xi1> to vector<8x256xi1>
    %92 = vector.shape_cast %60 : vector<1x256xf32> to vector<1x256xf32>
    %93 = vector.broadcast %92 : vector<1x256xf32> to vector<8x256xf32>
    %94 = arith.select %91, %93, %89 : vector<8x256xi1>, vector<8x256xf32>
    %95 = arith.subf %88, %94 : vector<8x256xf32>
    %cst_21 = arith.constant 0.000000e+00 : f32
    %96 = vector.broadcast %cst_21 : f32 to vector<8x256xf32>
    %97 = arith.cmpf one, %75, %96 : vector<8x256xf32>
    %cst_22 = arith.constant 0.000000e+00 : f32
    %98 = vector.broadcast %cst_22 : f32 to vector<8x256xf32>
    %99 = arith.cmpf one, %82, %98 : vector<8x256xf32>
    %100 = arith.ori %97, %99 : vector<8x256xi1>
    %cst_23 = arith.constant 0.000000e+00 : f32
    %101 = vector.broadcast %cst_23 : f32 to vector<8x256xf32>
    %102 = arith.cmpf one, %95, %101 : vector<8x256xf32>
    %103 = arith.ori %100, %102 : vector<8x256xi1>
    %104 = arith.extui %103 : vector<8x256xi1> to vector<8x256xi32>
    %105 = arith.sitofp %104 : vector<8x256xi32> to vector<8x256xf32>
    %c0_24 = arith.constant 0 : index
    %c0_25 = arith.constant 0 : index
    %106 = vector.load %arg4[%c0_24, %c0_25] : memref<8x256xf32, #tpu.memory_space<vmem>>, vector<8x256xf32>
    %c7_26 = arith.constant 7 : index
    %c0_27 = arith.constant 0 : index
    %107 = vector.load %arg5[%c7_26, %c0_27] : memref<8x256xf32, #tpu.memory_space<vmem>>, vector<1x256xf32>
    %108 = vector.broadcast %5 : f32 to vector<1x256xf32>
    %109 = arith.mulf %107, %108 : vector<1x256xf32>
    %c0_28 = arith.constant 0 : index
    %c0_29 = arith.constant 0 : index
    %110 = vector.load %arg6[%c0_28, %c0_29] : memref<8x256xf32, #tpu.memory_space<vmem>>, vector<1x256xf32>
    %111 = vector.broadcast %8 : f32 to vector<1x256xf32>
    %112 = arith.mulf %110, %111 : vector<1x256xf32>
    %c255_i32_30 = arith.constant 255 : i32
    %113 = tpu.dynamic_rotate %106 by %c255_i32_30 dim 1 : vector<8x256xf32>, i32 -> vector<8x256xf32>
    %114 = vector.broadcast %33 : vector<1x256xf32> to vector<8x256xf32>
    %115 = arith.mulf %113, %114 : vector<8x256xf32>
    %c1_i32_31 = arith.constant 1 : i32
    %116 = tpu.dynamic_rotate %106 by %c1_i32_31 dim 1 : vector<8x256xf32>, i32 -> vector<8x256xf32>
    %117 = vector.broadcast %29 : vector<1x256xf32> to vector<8x256xf32>
    %118 = arith.mulf %116, %117 : vector<8x256xf32>
    %119 = arith.subf %115, %118 : vector<8x256xf32>
    %c240_i32_32 = arith.constant 240 : i32
    %120 = tpu.dynamic_rotate %106 by %c240_i32_32 dim 1 : vector<8x256xf32>, i32 -> vector<8x256xf32>
    %121 = vector.broadcast %41 : vector<1x256xf32> to vector<8x256xf32>
    %122 = arith.mulf %120, %121 : vector<8x256xf32>
    %c16_i32_33 = arith.constant 16 : i32
    %123 = tpu.dynamic_rotate %106 by %c16_i32_33 dim 1 : vector<8x256xf32>, i32 -> vector<8x256xf32>
    %124 = vector.broadcast %37 : vector<1x256xf32> to vector<8x256xf32>
    %125 = arith.mulf %123, %124 : vector<8x256xf32>
    %126 = arith.subf %122, %125 : vector<8x256xf32>
    %c7_i32_34 = arith.constant 7 : i32
    %127 = tpu.dynamic_rotate %106 by %c7_i32_34 dim 0 : vector<8x256xf32>, i32 -> vector<8x256xf32>
    %128 = vector.shape_cast %46 : vector<8x1xi1> to vector<8x1xi1>
    %129 = vector.broadcast %128 : vector<8x1xi1> to vector<8x256xi1>
    %130 = vector.shape_cast %112 : vector<1x256xf32> to vector<1x256xf32>
    %131 = vector.broadcast %130 : vector<1x256xf32> to vector<8x256xf32>
    %132 = arith.select %129, %131, %127 : vector<8x256xi1>, vector<8x256xf32>
    %c1_i32_35 = arith.constant 1 : i32
    %133 = tpu.dynamic_rotate %106 by %c1_i32_35 dim 0 : vector<8x256xf32>, i32 -> vector<8x256xf32>
    %134 = vector.shape_cast %44 : vector<8x1xi1> to vector<8x1xi1>
    %135 = vector.broadcast %134 : vector<8x1xi1> to vector<8x256xi1>
    %136 = vector.shape_cast %109 : vector<1x256xf32> to vector<1x256xf32>
    %137 = vector.broadcast %136 : vector<1x256xf32> to vector<8x256xf32>
    %138 = arith.select %135, %137, %133 : vector<8x256xi1>, vector<8x256xf32>
    %139 = arith.subf %132, %138 : vector<8x256xf32>
    %cst_36 = arith.constant 0.000000e+00 : f32
    %140 = vector.broadcast %cst_36 : f32 to vector<8x256xf32>
    %141 = arith.cmpf one, %119, %140 : vector<8x256xf32>
    %cst_37 = arith.constant 0.000000e+00 : f32
    %142 = vector.broadcast %cst_37 : f32 to vector<8x256xf32>
    %143 = arith.cmpf one, %126, %142 : vector<8x256xf32>
    %144 = arith.ori %141, %143 : vector<8x256xi1>
    %cst_38 = arith.constant 0.000000e+00 : f32
    %145 = vector.broadcast %cst_38 : f32 to vector<8x256xf32>
    %146 = arith.cmpf one, %139, %145 : vector<8x256xf32>
    %147 = arith.ori %144, %146 : vector<8x256xi1>
    %148 = arith.extui %147 : vector<8x256xi1> to vector<8x256xi32>
    %149 = arith.sitofp %148 : vector<8x256xi32> to vector<8x256xf32>
    %150 = arith.mulf %105, %149 : vector<8x256xf32>
    %151 = vector.shape_cast %150 : vector<8x256xf32> to vector<1x8x256xf32>
    %cst_39 = arith.constant dense<0.000000e+00> : vector<1xf32>
    %152 = vector.multi_reduction <add>, %151, %cst_39 [1, 2] : vector<1x8x256xf32> to vector<1xf32>
    %153 = vector.shape_cast %152 : vector<1xf32> to vector<1x1x1xf32>
    %154 = vector.extract %153[0, 0, 0] : f32 from vector<1x1x1xf32>
    %155 = arith.addf %105, %149 : vector<8x256xf32>
    %156 = vector.shape_cast %155 : vector<8x256xf32> to vector<1x8x256xf32>
    %cst_40 = arith.constant dense<0.000000e+00> : vector<1xf32>
    %157 = vector.multi_reduction <add>, %156, %cst_40 [1, 2] : vector<1x8x256xf32> to vector<1xf32>
    %158 = vector.shape_cast %157 : vector<1xf32> to vector<1x1x1xf32>
    %159 = vector.extract %158[0, 0, 0] : f32 from vector<1x1x1xf32>
    %160 = tpu.iota {dimensions = array<i32: 0>} : vector<2x128xi32>
    %c0_41 = arith.constant 0 : index
    %c0_42 = arith.constant 0 : index
    %161 = vector.load %arg7[%c0_41, %c0_42] : memref<2x128xf32, #tpu.memory_space<vmem>>, vector<2x128xf32>
    %c0_i32_43 = arith.constant 0 : i32
    %162 = vector.broadcast %c0_i32_43 : i32 to vector<2x128xi32>
    %163 = arith.cmpi eq, %160, %162 : vector<2x128xi32>
    %164 = vector.broadcast %154 : f32 to vector<2x128xf32>
    %165 = vector.broadcast %159 : f32 to vector<2x128xf32>
    %166 = arith.select %163, %164, %165 : vector<2x128xi1>, vector<2x128xf32>
    %167 = arith.addf %161, %166 : vector<2x128xf32>
    %c0_44 = arith.constant 0 : index
    %c0_45 = arith.constant 0 : index
    %168 = vector.load %arg7[%c0_44, %c0_45] : memref<2x128xf32, #tpu.memory_space<vmem>>, vector<2x128xf32>
    tpu.vector_store %arg7[%c0_44, %c0_45], %167 {strides = array<i32>} : memref<2x128xf32, #tpu.memory_space<vmem>>, vector<2x128xf32>,
    return
  }
  func.func @transform_0(%arg0: i32) -> (i32, i32) {
    %c0_i32 = arith.constant 0 : i32
    %c0_i32_0 = arith.constant 0 : i32
    return %arg0, %c0_i32 : i32, i32
  }
  func.func @transform_1(%arg0: i32) -> (i32, i32) {
    %c1_i32 = arith.constant 1 : i32
    %0 = arith.muli %arg0, %c1_i32 : i32
    %c1_i32_0 = arith.constant 1 : i32
    %1 = arith.subi %0, %c1_i32_0 : i32
    %c0_i32 = arith.constant 0 : i32
    %2 = arith.maxsi %1, %c0_i32 : i32
    %c0_i32_1 = arith.constant 0 : i32
    %c0_i32_2 = arith.constant 0 : i32
    return %2, %c0_i32_1 : i32, i32
  }
  func.func @transform_2(%arg0: i32) -> (i32, i32) {
    %c1_i32 = arith.constant 1 : i32
    %0 = arith.addi %arg0, %c1_i32 : i32
    %c1_i32_0 = arith.constant 1 : i32
    %1 = arith.muli %0, %c1_i32_0 : i32
    %c1_i32_1 = arith.constant 1 : i32
    %2 = arith.minsi %1, %c1_i32_1 : i32
    %c0_i32 = arith.constant 0 : i32
    %c0_i32_2 = arith.constant 0 : i32
    return %2, %c0_i32 : i32, i32
  }
  func.func @transform_3(%arg0: i32) -> (i32, i32) {
    %c0_i32 = arith.constant 0 : i32
    %c0_i32_0 = arith.constant 0 : i32
    return %arg0, %c0_i32 : i32, i32
  }
  func.func @transform_4(%arg0: i32) -> (i32, i32) {
    %c1_i32 = arith.constant 1 : i32
    %0 = arith.muli %arg0, %c1_i32 : i32
    %c1_i32_0 = arith.constant 1 : i32
    %1 = arith.subi %0, %c1_i32_0 : i32
    %c0_i32 = arith.constant 0 : i32
    %2 = arith.maxsi %1, %c0_i32 : i32
    %c0_i32_1 = arith.constant 0 : i32
    %c0_i32_2 = arith.constant 0 : i32
    return %2, %c0_i32_1 : i32, i32
  }
  func.func @transform_5(%arg0: i32) -> (i32, i32) {
    %c1_i32 = arith.constant 1 : i32
    %0 = arith.addi %arg0, %c1_i32 : i32
    %c1_i32_0 = arith.constant 1 : i32
    %1 = arith.muli %0, %c1_i32_0 : i32
    %c1_i32_1 = arith.constant 1 : i32
    %2 = arith.minsi %1, %c1_i32_1 : i32
    %c0_i32 = arith.constant 0 : i32
    %c0_i32_2 = arith.constant 0 : i32
    return %2, %c0_i32 : i32, i32
  }
  func.func @transform_6(%arg0: i32) -> (i32, i32) {
    %c0_i32 = arith.constant 0 : i32
    %c0_i32_0 = arith.constant 0 : i32
    %c0_i32_1 = arith.constant 0 : i32
    return %c0_i32, %c0_i32_0 : i32, i32
  }
}

</mosaic_0001>

<llo_original>
// kernel: squeeze.4
$region0: #{squeeze.4}
  %s0 = inlined_call_operand.vmem [shape: f32[1,1,16,16,16], index: 0, kind: input, shape index: {}]
  %s1 = inlined_call_operand.vmem [shape: f32[16,256], index: 1, kind: output, shape index: {}]
  %v2 = vld [vmem:[%s0] ss:$8 sm:$0xf]
  %v3 = vld [vmem:[%s0] ss:$8 sm:$0xf0]
  %vm4 = vcmask 1047556
  %v5 = vsel %vm4, %v3, %v2
  %vm6 = vcmask 130048
  %7 = vst.msk [vmem:[%s1] ss:$8 sm:$0x3] %vm6, %v5
  %s8 = scalar_lea.vmem %s1, 4294967281
  %9 = vst.msk [vmem:[%s8] ss:$8 sm:$0xc] %vm6, %v5
  %s10 = scalar_lea.vmem %s1, 4294967266
  %11 = vst.msk [vmem:[%s10] ss:$8 sm:$0x30] %vm6, %v5
  %s12 = scalar_lea.vmem %s1, 4294967251
  %13 = vst.msk [vmem:[%s12] ss:$8 sm:$0xc0] %vm6, %v5
  %s14 = scalar_lea.vmem %s0, 64
  %v15 = vld [vmem:[%s14] ss:$8 sm:$0xf]
  %s16 = scalar_lea.vmem %s0, 64
  %v17 = vld [vmem:[%s16] ss:$8 sm:$0xf0]
  %vm18 = vcmask 1047556
  %v19 = vsel %vm18, %v17, %v15
  %vm20 = vcmask 130048
  %s21 = scalar_lea.vmem %s1, 4
  %22 = vst.msk [vmem:[%s21] ss:$8 sm:$0x3] %vm20, %v19
  %s23 = scalar_lea.vmem %s1, 4294967285
  %24 = vst.msk [vmem:[%s23] ss:$8 sm:$0xc] %vm20, %v19
  %s25 = scalar_lea.vmem %s1, 4294967270
  %26 = vst.msk [vmem:[%s25] ss:$8 sm:$0x30] %vm20, %v19
  %s27 = scalar_lea.vmem %s1, 4294967255
  %28 = vst.msk [vmem:[%s27] ss:$8 sm:$0xc0] %vm20, %v19
  %s29 = scalar_lea.vmem %s0, 128
  %v30 = vld [vmem:[%s29] ss:$8 sm:$0xf]
  %s31 = scalar_lea.vmem %s0, 128
  %v32 = vld [vmem:[%s31] ss:$8 sm:$0xf0]
  %vm33 = vcmask 1047556
  %v34 = vsel %vm33, %v32, %v30
  %vm35 = vcmask 130048
  %s36 = scalar_lea.vmem %s1, 16
  %37 = vst.msk [vmem:[%s36] ss:$8 sm:$0x3] %vm35, %v34
  %s38 = scalar_lea.vmem %s1, 1
  %39 = vst.msk [vmem:[%s38] ss:$8 sm:$0xc] %vm35, %v34
  %s40 = scalar_lea.vmem %s1, 4294967282
  %41 = vst.msk [vmem:[%s40] ss:$8 sm:$0x30] %vm35, %v34
  %s42 = scalar_lea.vmem %s1, 4294967267
  %43 = vst.msk [vmem:[%s42] ss:$8 sm:$0xc0] %vm35, %v34
  %s44 = scalar_lea.vmem %s0, 192
  %v45 = vld [vmem:[%s44] ss:$8 sm:$0xf]
  %s46 = scalar_lea.vmem %s0, 192
  %v47 = vld [vmem:[%s46] ss:$8 sm:$0xf0]
  %vm48 = vcmask 1047556
  %v49 = vsel %vm48, %v47, %v45
  %vm50 = vcmask 130048
  %s51 = scalar_lea.vmem %s1, 20
  %52 = vst.msk [vmem:[%s51] ss:$8 sm:$0x3] %vm50, %v49
  %s53 = scalar_lea.vmem %s1, 5
  %54 = vst.msk [vmem:[%s53] ss:$8 sm:$0xc] %vm50, %v49
  %s55 = scalar_lea.vmem %s1, 4294967286
  %56 = vst.msk [vmem:[%s55] ss:$8 sm:$0x30] %vm50, %v49
  %s57 = scalar_lea.vmem %s1, 4294967271
  %58 = vst.msk [vmem:[%s57] ss:$8 sm:$0xc0] %vm50, %v49
  %s59 = scalar_lea.vmem %s0, 7
  %s60 = smov 3
  %v61 = vld [vmem:[%s59] ss:$16 sm:%s60]
  %s62 = scalar_lea.vmem %s0, 7
  %s63 = smov 12
  %v64 = vld [vmem:[%s62] ss:$16 sm:%s63]
  %vm65 = vcmask 1043458
  %v66 = vsel %vm65, %v64, %v61
  %s67 = scalar_lea.vmem %s0, 7
  %s68 = smov 48
  %v69 = vld [vmem:[%s67] ss:$16 sm:%s68]
  %vm70 = vcmask 1045508
  %v71 = vsel %vm70, %v69, %v66
  %s72 = scalar_lea.vmem %s0, 7
  %s73 = smov 192
  %v74 = vld [vmem:[%s72] ss:$16 sm:%s73]
  %vm75 = vcmask 1047558
  %v76 = vsel %vm75, %v74, %v71
  %77 = vrot.lane.b32.xlu0 %v76, 112
  %v78 = vpop.permute.xlu0 %77
  %vm79 = vcmask 1048448
  %80 = vst.msk [vmem:[%s1] sm:$0xff] %vm79, %v78
  %s81 = scalar_lea.vmem %s0, 15
  %s82 = smov 3
  %v83 = vld [vmem:[%s81] ss:$16 sm:%s82]
  %s84 = scalar_lea.vmem %s0, 15
  %s85 = smov 12
  %v86 = vld [vmem:[%s84] ss:$16 sm:%s85]
  %vm87 = vcmask 1043458
  %v88 = vsel %vm87, %v86, %v83
  %s89 = scalar_lea.vmem %s0, 15
  %s90 = smov 48
  %v91 = vld [vmem:[%s89] ss:$16 sm:%s90]
  %vm92 = vcmask 1045508
  %v93 = vsel %vm92, %v91, %v88
  %s94 = scalar_lea.vmem %s0, 15
  %s95 = smov 192
  %v96 = vld [vmem:[%s94] ss:$16 sm:%s95]
  %vm97 = vcmask 1047558
  %v98 = vsel %vm97, %v96, %v93
  %99 = vrot.lane.b32.xlu0 %v98, 112
  %v100 = vpop.permute.xlu0 %99
  %vm101 = vcmask 1048448
  %s102 = scalar_lea.vmem %s1, 8
  %103 = vst.msk [vmem:[%s102] sm:$0xff] %vm101, %v100
  %s104 = scalar_lea.vmem %s0, 135
  %s105 = smov 3
  %v106 = vld [vmem:[%s104] ss:$16 sm:%s105]
  %s107 = scalar_lea.vmem %s0, 135
  %s108 = smov 12
  %v109 = vld [vmem:[%s107] ss:$16 sm:%s108]
  %vm110 = vcmask 1043458
  %v111 = vsel %vm110, %v109, %v106
  %s112 = scalar_lea.vmem %s0, 135
  %s113 = smov 48
  %v114 = vld [vmem:[%s112] ss:$16 sm:%s113]
  %vm115 = vcmask 1045508
  %v116 = vsel %vm115, %v114, %v111
  %s117 = scalar_lea.vmem %s0, 135
  %s118 = smov 192
  %v119 = vld [vmem:[%s117] ss:$16 sm:%s118]
  %vm120 = vcmask 1047558
  %v121 = vsel %vm120, %v119, %v116
  %122 = vrot.lane.b32.xlu0 %v121, 112
  %v123 = vpop.permute.xlu0 %122
  %vm124 = vcmask 1048448
  %s125 = scalar_lea.vmem %s1, 16
  %126 = vst.msk [vmem:[%s125] sm:$0xff] %vm124, %v123
  %s127 = scalar_lea.vmem %s0, 143
  %s128 = smov 3
  %v129 = vld [vmem:[%s127] ss:$16 sm:%s128]
  %s130 = scalar_lea.vmem %s0, 143
  %s131 = smov 12
  %v132 = vld [vmem:[%s130] ss:$16 sm:%s131]
  %vm133 = vcmask 1043458
  %v134 = vsel %vm133, %v132, %v129
  %s135 = scalar_lea.vmem %s0, 143
  %s136 = smov 48
  %v137 = vld [vmem:[%s135] ss:$16 sm:%s136]
  %vm138 = vcmask 1045508
  %v139 = vsel %vm138, %v137, %v134
  %s140 = scalar_lea.vmem %s0, 143
  %s141 = smov 192
  %v142 = vld [vmem:[%s140] ss:$16 sm:%s141]
  %vm143 = vcmask 1047558
  %v144 = vsel %vm143, %v142, %v139
  %145 = vrot.lane.b32.xlu0 %v144, 112
  %v146 = vpop.permute.xlu0 %145
  %vm147 = vcmask 1048448
  %s148 = scalar_lea.vmem %s1, 24
  %149 = vst.msk [vmem:[%s148] sm:$0xff] %vm147, %v146
  %s150 = scalar_lea.vmem %s0, 6
  %s151 = smov 3
  %v152 = vld [vmem:[%s150] ss:$16 sm:%s151]
  %s153 = scalar_lea.vmem %s0, 6
  %s154 = smov 12
  %v155 = vld [vmem:[%s153] ss:$16 sm:%s154]
  %vm156 = vcmask 1043458
  %v157 = vsel %vm156, %v155, %v152
  %s158 = scalar_lea.vmem %s0, 6
  %s159 = smov 48
  %v160 = vld [vmem:[%s158] ss:$16 sm:%s159]
  %vm161 = vcmask 1045508
  %v162 = vsel %vm161, %v160, %v157
  %s163 = scalar_lea.vmem %s0, 6
  %s164 = smov 192
  %v165 = vld [vmem:[%s163] ss:$16 sm:%s164]
  %vm166 = vcmask 1047558
  %v167 = vsel %vm166, %v165, %v162
  %168 = vrot.lane.b32.xlu0 %v167, 96
  %v169 = vpop.permute.xlu0 %168
  %vm170 = vcmask 917248
  %171 = vst.msk [vmem:[%s1] sm:$0xff] %vm170, %v169
  %s172 = scalar_lea.vmem %s0, 14
  %s173 = smov 3
  %v174 = vld [vmem:[%s172] ss:$16 sm:%s173]
  %s175 = scalar_lea.vmem %s0, 14
  %s176 = smov 12
  %v177 = vld [vmem:[%s175] ss:$16 sm:%s176]
  %vm178 = vcmask 1043458
  %v179 = vsel %vm178, %v177, %v174
  %s180 = scalar_lea.vmem %s0, 14
  %s181 = smov 48
  %v182 = vld [vmem:[%s180] ss:$16 sm:%s181]
  %vm183 = vcmask 1045508
  %v184 = vsel %vm183, %v182, %v179
  %s185 = scalar_lea.vmem %s0, 14
  %s186 = smov 192
  %v187 = vld [vmem:[%s185] ss:$16 sm:%s186]
  %vm188 = vcmask 1047558
  %v189 = vsel %vm188, %v187, %v184
  %190 = vrot.lane.b32.xlu0 %v189, 96
  %v191 = vpop.permute.xlu0 %190
  %vm192 = vcmask 917248
  %s193 = scalar_lea.vmem %s1, 8
  %194 = vst.msk [vmem:[%s193] sm:$0xff] %vm192, %v191
  %s195 = scalar_lea.vmem %s0, 134
  %s196 = smov 3
  %v197 = vld [vmem:[%s195] ss:$16 sm:%s196]
  %s198 = scalar_lea.vmem %s0, 134
  %s199 = smov 12
  %v200 = vld [vmem:[%s198] ss:$16 sm:%s199]
  %vm201 = vcmask 1043458
  %v202 = vsel %vm201, %v200, %v197
  %s203 = scalar_lea.vmem %s0, 134
  %s204 = smov 48
  %v205 = vld [vmem:[%s203] ss:$16 sm:%s204]
  %vm206 = vcmask 1045508
  %v207 = vsel %vm206, %v205, %v202
  %s208 = scalar_lea.vmem %s0, 134
  %s209 = smov 192
  %v210 = vld [vmem:[%s208] ss:$16 sm:%s209]
  %vm211 = vcmask 1047558
  %v212 = vsel %vm211, %v210, %v207
  %213 = vrot.lane.b32.xlu0 %v212, 96
  %v214 = vpop.permute.xlu0 %213
  %vm215 = vcmask 917248
  %s216 = scalar_lea.vmem %s1, 16
  %217 = vst.msk [vmem:[%s216] sm:$0xff] %vm215, %v214
  %s218 = scalar_lea.vmem %s0, 142
  %s219 = smov 3
  %v220 = vld [vmem:[%s218] ss:$16 sm:%s219]
  %s221 = scalar_lea.vmem %s0, 142
  %s222 = smov 12
  %v223 = vld [vmem:[%s221] ss:$16 sm:%s222]
  %vm224 = vcmask 1043458
  %v225 = vsel %vm224, %v223, %v220
  %s226 = scalar_lea.vmem %s0, 142
  %s227 = smov 48
  %v228 = vld [vmem:[%s226] ss:$16 sm:%s227]
  %vm229 = vcmask 1045508
  %v230 = vsel %vm229, %v228, %v225
  %s231 = scalar_lea.vmem %s0, 142
  %s232 = smov 192
  %v233 = vld [vmem:[%s231] ss:$16 sm:%s232]
  %vm234 = vcmask 1047558
  %v235 = vsel %vm234, %v233, %v230
  %236 = vrot.lane.b32.xlu0 %v235, 96
  %v237 = vpop.permute.xlu0 %236
  %vm238 = vcmask 917248
  %s239 = scalar_lea.vmem %s1, 24
  %240 = vst.msk [vmem:[%s239] sm:$0xff] %vm238, %v237
  %s241 = scalar_lea.vmem %s0, 5
  %s242 = smov 3
  %v243 = vld [vmem:[%s241] ss:$16 sm:%s242]
  %s244 = scalar_lea.vmem %s0, 5
  %s245 = smov 12
  %v246 = vld [vmem:[%s244] ss:$16 sm:%s245]
  %vm247 = vcmask 1043458
  %v248 = vsel %vm247, %v246, %v243
  %s249 = scalar_lea.vmem %s0, 5
  %s250 = smov 48
  %v251 = vld [vmem:[%s249] ss:$16 sm:%s250]
  %vm252 = vcmask 1045508
  %v253 = vsel %vm252, %v251, %v248
  %s254 = scalar_lea.vmem %s0, 5
  %s255 = smov 192
  %v256 = vld [vmem:[%s254] ss:$16 sm:%s255]
  %vm257 = vcmask 1047558
  %v258 = vsel %vm257, %v256, %v253
  %259 = vrot.lane.b32.xlu0 %v258, 80
  %v260 = vpop.permute.xlu0 %259
  %vm261 = vcmask 786048
  %262 = vst.msk [vmem:[%s1] sm:$0xff] %vm261, %v260
  %s263 = scalar_lea.vmem %s0, 13
  %s264 = smov 3
  %v265 = vld [vmem:[%s263] ss:$16 sm:%s264]
  %s266 = scalar_lea.vmem %s0, 13
  %s267 = smov 12
  %v268 = vld [vmem:[%s266] ss:$16 sm:%s267]
  %vm269 = vcmask 1043458
  %v270 = vsel %vm269, %v268, %v265
  %s271 = scalar_lea.vmem %s0, 13
  %s272 = smov 48
  %v273 = vld [vmem:[%s271] ss:$16 sm:%s272]
  %vm274 = vcmask 1045508
  %v275 = vsel %vm274, %v273, %v270
  %s276 = scalar_lea.vmem %s0, 13
  %s277 = smov 192
  %v278 = vld [vmem:[%s276] ss:$16 sm:%s277]
  %vm279 = vcmask 1047558
  %v280 = vsel %vm279, %v278, %v275
  %281 = vrot.lane.b32.xlu0 %v280, 80
  %v282 = vpop.permute.xlu0 %281
  %vm283 = vcmask 786048
  %s284 = scalar_lea.vmem %s1, 8
  %285 = vst.msk [vmem:[%s284] sm:$0xff] %vm283, %v282
  %s286 = scalar_lea.vmem %s0, 133
  %s287 = smov 3
  %v288 = vld [vmem:[%s286] ss:$16 sm:%s287]
  %s289 = scalar_lea.vmem %s0, 133
  %s290 = smov 12
  %v291 = vld [vmem:[%s289] ss:$16 sm:%s290]
  %vm292 = vcmask 1043458
  %v293 = vsel %vm292, %v291, %v288
  %s294 = scalar_lea.vmem %s0, 133
  %s295 = smov 48
  %v296 = vld [vmem:[%s294] ss:$16 sm:%s295]
  %vm297 = vcmask 1045508
  %v298 = vsel %vm297, %v296, %v293
  %s299 = scalar_lea.vmem %s0, 133
  %s300 = smov 192
  %v301 = vld [vmem:[%s299] ss:$16 sm:%s300]
  %vm302 = vcmask 1047558
  %v303 = vsel %vm302, %v301, %v298
  %304 = vrot.lane.b32.xlu0 %v303, 80
  %v305 = vpop.permute.xlu0 %304
  %vm306 = vcmask 786048
  %s307 = scalar_lea.vmem %s1, 16
  %308 = vst.msk [vmem:[%s307] sm:$0xff] %vm306, %v305
  %s309 = scalar_lea.vmem %s0, 141
  %s310 = smov 3
  %v311 = vld [vmem:[%s309] ss:$16 sm:%s310]
  %s312 = scalar_lea.vmem %s0, 141
  %s313 = smov 12
  %v314 = vld [vmem:[%s312] ss:$16 sm:%s313]
  %vm315 = vcmask 1043458
  %v316 = vsel %vm315, %v314, %v311
  %s317 = scalar_lea.vmem %s0, 141
  %s318 = smov 48
  %v319 = vld [vmem:[%s317] ss:$16 sm:%s318]
  %vm320 = vcmask 1045508
  %v321 = vsel %vm320, %v319, %v316
  %s322 = scalar_lea.vmem %s0, 141
  %s323 = smov 192
  %v324 = vld [vmem:[%s322] ss:$16 sm:%s323]
  %vm325 = vcmask 1047558
  %v326 = vsel %vm325, %v324, %v321
  %327 = vrot.lane.b32.xlu0 %v326, 80
  %v328 = vpop.permute.xlu0 %327
  %vm329 = vcmask 786048
  %s330 = scalar_lea.vmem %s1, 24
  %331 = vst.msk [vmem:[%s330] sm:$0xff] %vm329, %v328
  %s332 = scalar_lea.vmem %s0, 4
  %s333 = smov 3
  %v334 = vld [vmem:[%s332] ss:$16 sm:%s333]
  %s335 = scalar_lea.vmem %s0, 4
  %s336 = smov 12
  %v337 = vld [vmem:[%s335] ss:$16 sm:%s336]
  %vm338 = vcmask 1043458
  %v339 = vsel %vm338, %v337, %v334
  %s340 = scalar_lea.vmem %s0, 4
  %s341 = smov 48
  %v342 = vld [vmem:[%s340] ss:$16 sm:%s341]
  %vm343 = vcmask 1045508
  %v344 = vsel %vm343, %v342, %v339
  %s345 = scalar_lea.vmem %s0, 4
  %s346 = smov 192
  %v347 = vld [vmem:[%s345] ss:$16 sm:%s346]
  %vm348 = vcmask 1047558
  %v349 = vsel %vm348, %v347, %v344
  %350 = vrot.lane.b32.xlu0 %v349, 64
  %v351 = vpop.permute.xlu0 %350
  %vm352 = vcmask 654848
  %353 = vst.msk [vmem:[%s1] sm:$0xff] %vm352, %v351
  %s354 = scalar_lea.vmem %s0, 12
  %s355 = smov 3
  %v356 = vld [vmem:[%s354] ss:$16 sm:%s355]
  %s357 = scalar_lea.vmem %s0, 12
  %s358 = smov 12
  %v359 = vld [vmem:[%s357] ss:$16 sm:%s358]
  %vm360 = vcmask 1043458
  %v361 = vsel %vm360, %v359, %v356
  %s362 = scalar_lea.vmem %s0, 12
  %s363 = smov 48
  %v364 = vld [vmem:[%s362] ss:$16 sm:%s363]
  %vm365 = vcmask 1045508
  %v366 = vsel %vm365, %v364, %v361
  %s367 = scalar_lea.vmem %s0, 12
  %s368 = smov 192
  %v369 = vld [vmem:[%s367] ss:$16 sm:%s368]
  %vm370 = vcmask 1047558
  %v371 = vsel %vm370, %v369, %v366
  %372 = vrot.lane.b32.xlu0 %v371, 64
  %v373 = vpop.permute.xlu0 %372
  %vm374 = vcmask 654848
  %s375 = scalar_lea.vmem %s1, 8
  %376 = vst.msk [vmem:[%s375] sm:$0xff] %vm374, %v373
  %s377 = scalar_lea.vmem %s0, 132
  %s378 = smov 3
  %v379 = vld [vmem:[%s377] ss:$16 sm:%s378]
  %s380 = scalar_lea.vmem %s0, 132
  %s381 = smov 12
  %v382 = vld [vmem:[%s380] ss:$16 sm:%s381]
  %vm383 = vcmask 1043458
  %v384 = vsel %vm383, %v382, %v379
  %s385 = scalar_lea.vmem %s0, 132
  %s386 = smov 48
  %v387 = vld [vmem:[%s385] ss:$16 sm:%s386]
  %vm388 = vcmask 1045508
  %v389 = vsel %vm388, %v387, %v384
  %s390 = scalar_lea.vmem %s0, 132
  %s391 = smov 192
  %v392 = vld [vmem:[%s390] ss:$16 sm:%s391]
  %vm393 = vcmask 1047558
  %v394 = vsel %vm393, %v392, %v389
  %395 = vrot.lane.b32.xlu0 %v394, 64
  %v396 = vpop.permute.xlu0 %395
  %vm397 = vcmask 654848
  %s398 = scalar_lea.vmem %s1, 16
  %399 = vst.msk [vmem:[%s398] sm:$0xff] %vm397, %v396
  %s400 = scalar_lea.vmem %s0, 140
  %s401 = smov 3
  %v402 = vld [vmem:[%s400] ss:$16 sm:%s401]
  %s403 = scalar_lea.vmem %s0, 140
  %s404 = smov 12
  %v405 = vld [vmem:[%s403] ss:$16 sm:%s404]
  %vm406 = vcmask 1043458
  %v407 = vsel %vm406, %v405, %v402
  %s408 = scalar_lea.vmem %s0, 140
  %s409 = smov 48
  %v410 = vld [vmem:[%s408] ss:$16 sm:%s409]
  %vm411 = vcmask 1045508
  %v412 = vsel %vm411, %v410, %v407
  %s413 = scalar_lea.vmem %s0, 140
  %s414 = smov 192
  %v415 = vld [vmem:[%s413] ss:$16 sm:%s414]
  %vm416 = vcmask 1047558
  %v417 = vsel %vm416, %v415, %v412
  %418 = vrot.lane.b32.xlu0 %v417, 64
  %v419 = vpop.permute.xlu0 %418
  %vm420 = vcmask 654848
  %s421 = scalar_lea.vmem %s1, 24
  %422 = vst.msk [vmem:[%s421] sm:$0xff] %vm420, %v419
  %s423 = scalar_lea.vmem %s0, 3
  %s424 = smov 3
  %v425 = vld [vmem:[%s423] ss:$16 sm:%s424]
  %s426 = scalar_lea.vmem %s0, 3
  %s427 = smov 12
  %v428 = vld [vmem:[%s426] ss:$16 sm:%s427]
  %vm429 = vcmask 1043458
  %v430 = vsel %vm429, %v428, %v425
  %s431 = scalar_lea.vmem %s0, 3
  %s432 = smov 48
  %v433 = vld [vmem:[%s431] ss:$16 sm:%s432]
  %vm434 = vcmask 1045508
  %v435 = vsel %vm434, %v433, %v430
  %s436 = scalar_lea.vmem %s0, 3
  %s437 = smov 192
  %v438 = vld [vmem:[%s436] ss:$16 sm:%s437]
  %vm439 = vcmask 1047558
  %v440 = vsel %vm439, %v438, %v435
  %441 = vrot.lane.b32.xlu0 %v440, 48
  %v442 = vpop.permute.xlu0 %441
  %vm443 = vcmask 523648
  %444 = vst.msk [vmem:[%s1] sm:$0xff] %vm443, %v442
  %s445 = scalar_lea.vmem %s0, 11
  %s446 = smov 3
  %v447 = vld [vmem:[%s445] ss:$16 sm:%s446]
  %s448 = scalar_lea.vmem %s0, 11
  %s449 = smov 12
  %v450 = vld [vmem:[%s448] ss:$16 sm:%s449]
  %vm451 = vcmask 1043458
  %v452 = vsel %vm451, %v450, %v447
  %s453 = scalar_lea.vmem %s0, 11
  %s454 = smov 48
  %v455 = vld [vmem:[%s453] ss:$16 sm:%s454]
  %vm456 = vcmask 1045508
  %v457 = vsel %vm456, %v455, %v452
  %s458 = scalar_lea.vmem %s0, 11
  %s459 = smov 192
  %v460 = vld [vmem:[%s458] ss:$16 sm:%s459]
  %vm461 = vcmask 1047558
  %v462 = vsel %vm461, %v460, %v457
  %463 = vrot.lane.b32.xlu0 %v462, 48
  %v464 = vpop.permute.xlu0 %463
  %vm465 = vcmask 523648
  %s466 = scalar_lea.vmem %s1, 8
  %467 = vst.msk [vmem:[%s466] sm:$0xff] %vm465, %v464
  %s468 = scalar_lea.vmem %s0, 131
  %s469 = smov 3
  %v470 = vld [vmem:[%s468] ss:$16 sm:%s469]
  %s471 = scalar_lea.vmem %s0, 131
  %s472 = smov 12
  %v473 = vld [vmem:[%s471] ss:$16 sm:%s472]
  %vm474 = vcmask 1043458
  %v475 = vsel %vm474, %v473, %v470
  %s476 = scalar_lea.vmem %s0, 131
  %s477 = smov 48
  %v478 = vld [vmem:[%s476] ss:$16 sm:%s477]
  %vm479 = vcmask 1045508
  %v480 = vsel %vm479, %v478, %v475
  %s481 = scalar_lea.vmem %s0, 131
  %s482 = smov 192
  %v483 = vld [vmem:[%s481] ss:$16 sm:%s482]
  %vm484 = vcmask 1047558
  %v485 = vsel %vm484, %v483, %v480
  %486 = vrot.lane.b32.xlu0 %v485, 48
  %v487 = vpop.permute.xlu0 %486
  %vm488 = vcmask 523648
  %s489 = scalar_lea.vmem %s1, 16
  %490 = vst.msk [vmem:[%s489] sm:$0xff] %vm488, %v487
  %s491 = scalar_lea.vmem %s0, 139
  %s492 = smov 3
  %v493 = vld [vmem:[%s491] ss:$16 sm:%s492]
  %s494 = scalar_lea.vmem %s0, 139
  %s495 = smov 12
  %v496 = vld [vmem:[%s494] ss:$16 sm:%s495]
  %vm497 = vcmask 1043458
  %v498 = vsel %vm497, %v496, %v493
  %s499 = scalar_lea.vmem %s0, 139
  %s500 = smov 48
  %v501 = vld [vmem:[%s499] ss:$16 sm:%s500]
  %vm502 = vcmask 1045508
  %v503 = vsel %vm502, %v501, %v498
  %s504 = scalar_lea.vmem %s0, 139
  %s505 = smov 192
  %v506 = vld [vmem:[%s504] ss:$16 sm:%s505]
  %vm507 = vcmask 1047558
  %v508 = vsel %vm507, %v506, %v503
  %509 = vrot.lane.b32.xlu0 %v508, 48
  %v510 = vpop.permute.xlu0 %509
  %vm511 = vcmask 523648
  %s512 = scalar_lea.vmem %s1, 24
  %513 = vst.msk [vmem:[%s512] sm:$0xff] %vm511, %v510
  %s514 = scalar_lea.vmem %s0, 2
  %s515 = smov 3
  %v516 = vld [vmem:[%s514] ss:$16 sm:%s515]
  %s517 = scalar_lea.vmem %s0, 2
  %s518 = smov 12
  %v519 = vld [vmem:[%s517] ss:$16 sm:%s518]
  %vm520 = vcmask 1043458
  %v521 = vsel %vm520, %v519, %v516
  %s522 = scalar_lea.vmem %s0, 2
  %s523 = smov 48
  %v524 = vld [vmem:[%s522] ss:$16 sm:%s523]
  %vm525 = vcmask 1045508
  %v526 = vsel %vm525, %v524, %v521
  %s527 = scalar_lea.vmem %s0, 2
  %s528 = smov 192
  %v529 = vld [vmem:[%s527] ss:$16 sm:%s528]
  %vm530 = vcmask 1047558
  %v531 = vsel %vm530, %v529, %v526
  %532 = vrot.lane.b32.xlu0 %v531, 32
  %v533 = vpop.permute.xlu0 %532
  %vm534 = vcmask 392448
  %535 = vst.msk [vmem:[%s1] sm:$0xff] %vm534, %v533
  %s536 = scalar_lea.vmem %s0, 10
  %s537 = smov 3
  %v538 = vld [vmem:[%s536] ss:$16 sm:%s537]
  %s539 = scalar_lea.vmem %s0, 10
  %s540 = smov 12
  %v541 = vld [vmem:[%s539] ss:$16 sm:%s540]
  %vm542 = vcmask 1043458
  %v543 = vsel %vm542, %v541, %v538
  %s544 = scalar_lea.vmem %s0, 10
  %s545 = smov 48
  %v546 = vld [vmem:[%s544] ss:$16 sm:%s545]
  %vm547 = vcmask 1045508
  %v548 = vsel %vm547, %v546, %v543
  %s549 = scalar_lea.vmem %s0, 10
  %s550 = smov 192
  %v551 = vld [vmem:[%s549] ss:$16 sm:%s550]
  %vm552 = vcmask 1047558
  %v553 = vsel %vm552, %v551, %v548
  %554 = vrot.lane.b32.xlu0 %v553, 32
  %v555 = vpop.permute.xlu0 %554
  %vm556 = vcmask 392448
  %s557 = scalar_lea.vmem %s1, 8
  %558 = vst.msk [vmem:[%s557] sm:$0xff] %vm556, %v555
  %s559 = scalar_lea.vmem %s0, 130
  %s560 = smov 3
  %v561 = vld [vmem:[%s559] ss:$16 sm:%s560]
  %s562 = scalar_lea.vmem %s0, 130
  %s563 = smov 12
  %v564 = vld [vmem:[%s562] ss:$16 sm:%s563]
  %vm565 = vcmask 1043458
  %v566 = vsel %vm565, %v564, %v561
  %s567 = scalar_lea.vmem %s0, 130
  %s568 = smov 48
  %v569 = vld [vmem:[%s567] ss:$16 sm:%s568]
  %vm570 = vcmask 1045508
  %v571 = vsel %vm570, %v569, %v566
  %s572 = scalar_lea.vmem %s0, 130
  %s573 = smov 192
  %v574 = vld [vmem:[%s572] ss:$16 sm:%s573]
  %vm575 = vcmask 1047558
  %v576 = vsel %vm575, %v574, %v571
  %577 = vrot.lane.b32.xlu0 %v576, 32
  %v578 = vpop.permute.xlu0 %577
  %vm579 = vcmask 392448
  %s580 = scalar_lea.vmem %s1, 16
  %581 = vst.msk [vmem:[%s580] sm:$0xff] %vm579, %v578
  %s582 = scalar_lea.vmem %s0, 138
  %s583 = smov 3
  %v584 = vld [vmem:[%s582] ss:$16 sm:%s583]
  %s585 = scalar_lea.vmem %s0, 138
  %s586 = smov 12
  %v587 = vld [vmem:[%s585] ss:$16 sm:%s586]
  %vm588 = vcmask 1043458
  %v589 = vsel %vm588, %v587, %v584
  %s590 = scalar_lea.vmem %s0, 138
  %s591 = smov 48
  %v592 = vld [vmem:[%s590] ss:$16 sm:%s591]
  %vm593 = vcmask 1045508
  %v594 = vsel %vm593, %v592, %v589
  %s595 = scalar_lea.vmem %s0, 138
  %s596 = smov 192
  %v597 = vld [vmem:[%s595] ss:$16 sm:%s596]
  %vm598 = vcmask 1047558
  %v599 = vsel %vm598, %v597, %v594
  %600 = vrot.lane.b32.xlu0 %v599, 32
  %v601 = vpop.permute.xlu0 %600
  %vm602 = vcmask 392448
  %s603 = scalar_lea.vmem %s1, 24
  %604 = vst.msk [vmem:[%s603] sm:$0xff] %vm602, %v601
  %s605 = scalar_lea.vmem %s0, 1
  %s606 = smov 3
  %v607 = vld [vmem:[%s605] ss:$16 sm:%s606]
  %s608 = scalar_lea.vmem %s0, 1
  %s609 = smov 12
  %v610 = vld [vmem:[%s608] ss:$16 sm:%s609]
  %vm611 = vcmask 1043458
  %v612 = vsel %vm611, %v610, %v607
  %s613 = scalar_lea.vmem %s0, 1
  %s614 = smov 48
  %v615 = vld [vmem:[%s613] ss:$16 sm:%s614]
  %vm616 = vcmask 1045508
  %v617 = vsel %vm616, %v615, %v612
  %s618 = scalar_lea.vmem %s0, 1
  %s619 = smov 192
  %v620 = vld [vmem:[%s618] ss:$16 sm:%s619]
  %vm621 = vcmask 1047558
  %v622 = vsel %vm621, %v620, %v617
  %623 = vrot.lane.b32.xlu0 %v622, 16
  %v624 = vpop.permute.xlu0 %623
  %vm625 = vcmask 261248
  %626 = vst.msk [vmem:[%s1] sm:$0xff] %vm625, %v624
  %s627 = scalar_lea.vmem %s0, 9
  %s628 = smov 3
  %v629 = vld [vmem:[%s627] ss:$16 sm:%s628]
  %s630 = scalar_lea.vmem %s0, 9
  %s631 = smov 12
  %v632 = vld [vmem:[%s630] ss:$16 sm:%s631]
  %vm633 = vcmask 1043458
  %v634 = vsel %vm633, %v632, %v629
  %s635 = scalar_lea.vmem %s0, 9
  %s636 = smov 48
  %v637 = vld [vmem:[%s635] ss:$16 sm:%s636]
  %vm638 = vcmask 1045508
  %v639 = vsel %vm638, %v637, %v634
  %s640 = scalar_lea.vmem %s0, 9
  %s641 = smov 192
  %v642 = vld [vmem:[%s640] ss:$16 sm:%s641]
  %vm643 = vcmask 1047558
  %v644 = vsel %vm643, %v642, %v639
  %645 = vrot.lane.b32.xlu0 %v644, 16
  %v646 = vpop.permute.xlu0 %645
  %vm647 = vcmask 261248
  %s648 = scalar_lea.vmem %s1, 8
  %649 = vst.msk [vmem:[%s648] sm:$0xff] %vm647, %v646
  %s650 = scalar_lea.vmem %s0, 129
  %s651 = smov 3
  %v652 = vld [vmem:[%s650] ss:$16 sm:%s651]
  %s653 = scalar_lea.vmem %s0, 129
  %s654 = smov 12
  %v655 = vld [vmem:[%s653] ss:$16 sm:%s654]
  %vm656 = vcmask 1043458
  %v657 = vsel %vm656, %v655, %v652
  %s658 = scalar_lea.vmem %s0, 129
  %s659 = smov 48
  %v660 = vld [vmem:[%s658] ss:$16 sm:%s659]
  %vm661 = vcmask 1045508
  %v662 = vsel %vm661, %v660, %v657
  %s663 = scalar_lea.vmem %s0, 129
  %s664 = smov 192
  %v665 = vld [vmem:[%s663] ss:$16 sm:%s664]
  %vm666 = vcmask 1047558
  %v667 = vsel %vm666, %v665, %v662
  %668 = vrot.lane.b32.xlu0 %v667, 16
  %v669 = vpop.permute.xlu0 %668
  %vm670 = vcmask 261248
  %s671 = scalar_lea.vmem %s1, 16
  %672 = vst.msk [vmem:[%s671] sm:$0xff] %vm670, %v669
  %s673 = scalar_lea.vmem %s0, 137
  %s674 = smov 3
  %v675 = vld [vmem:[%s673] ss:$16 sm:%s674]
  %s676 = scalar_lea.vmem %s0, 137
  %s677 = smov 12
  %v678 = vld [vmem:[%s676] ss:$16 sm:%s677]
  %vm679 = vcmask 1043458
  %v680 = vsel %vm679, %v678, %v675
  %s681 = scalar_lea.vmem %s0, 137
  %s682 = smov 48
  %v683 = vld [vmem:[%s681] ss:$16 sm:%s682]
  %vm684 = vcmask 1045508
  %v685 = vsel %vm684, %v683, %v680
  %s686 = scalar_lea.vmem %s0, 137
  %s687 = smov 192
  %v688 = vld [vmem:[%s686] ss:$16 sm:%s687]
  %vm689 = vcmask 1047558
  %v690 = vsel %vm689, %v688, %v685
  %691 = vrot.lane.b32.xlu0 %v690, 16
  %v692 = vpop.permute.xlu0 %691
  %vm693 = vcmask 261248
  %s694 = scalar_lea.vmem %s1, 24
  %695 = vst.msk [vmem:[%s694] sm:$0xff] %vm693, %v692

// kernel: boundary_loss.1
$region0: #{boundary_loss.1}
  #allocation0 [shape = 'u32[]', space=smem, size = 0x4, offset = 0x4, fixed_abs, tag = 'smem constant byte address 0x4 - core index']
  #allocation1 [shape = 'u32[144,128]{1,0:T(1,128)}', space=vmem, size = 0x12000, scoped, tag = 'internal scratch']
  %s0 = inlined_call_operand.vmem [shape: f32[16,256], index: 0, kind: input, shape index: {}, may-alias: {0,1,2}]
  %s1 = inlined_call_operand.vmem [shape: f32[16,256], index: 1, kind: input, shape index: {}, may-alias: {0,1,2}]
  %s2 = inlined_call_operand.vmem [shape: f32[16,256], index: 2, kind: input, shape index: {}, may-alias: {0,1,2}]
  %s3 = inlined_call_operand.vmem [shape: f32[16,256], index: 3, kind: input, shape index: {}, may-alias: {3,4,5}]
  %s4 = inlined_call_operand.vmem [shape: f32[16,256], index: 4, kind: input, shape index: {}, may-alias: {3,4,5}]
  %s5 = inlined_call_operand.vmem [shape: f32[16,256], index: 5, kind: input, shape index: {}, may-alias: {3,4,5}]
  %s6 = inlined_call_operand.vmem [shape: f32[2,128], index: 6, kind: output, shape index: {}]
  %s7 = sld [smem:[#allocation0]]
  $region61: #{boundary_loss.1} parent=0
    _
  %s9 = ssub.s32 1, %s7
  %s10 = scalar_select 0, %s9, %s7
  loop: start=0, step=1, limit=4
  $region2: #{boundary_loss.1} parent=0 // loop_pre_header
    _
  $region3: #{boundary_loss.1} parent=0 // loop_header
    %s12 = sphi 0, %s16
    %p13 = scmp.ge.s32.totalorder %s12, 4
    %s22 = sphi 0, %s24
    %s25 = sphi 0, %s22
    %s26 = sphi 0, %s25
    %s42 = sphi 0, %s26
    %s54 = sphi 0, %s56
    %s57 = sphi 0, %s54
    %s58 = sphi 0, %s57
    %s74 = sphi 0, %s58
    %s86 = sphi 0, %s88
    %s89 = sphi 0, %s86
    %s90 = sphi 0, %s89
    %s106 = sphi 0, %s90
    %s112 = sphi 0, %s114
    %s115 = sphi 0, %s112
    %s116 = sphi 0, %s115
    %s132 = sphi 0, %s116
    %s144 = sphi 0, %s146
    %s147 = sphi 0, %s144
    %s148 = sphi 0, %s147
    %s164 = sphi 0, %s148
    %s176 = sphi 0, %s178
    %s179 = sphi 0, %s176
    %s180 = sphi 0, %s179
    %s196 = sphi 0, %s180
    %s200 = sphi 0, %s200
    %s202 = sphi 0, %s200
    %s203 = sphi 0, %s202
    %s217 = sphi 0, %s203
  $region4: #{boundary_loss.1} parent=0 // loop_header_branch
    %15 = sbr.rel (%p13) target = $region8
  $region5: #{boundary_loss.1} parent=0 // loop_body
    %s17 = ssub.s32 %s12, 1
    %s18 = ssub.s32 %s12, 2
    %s19 = sadd.s32 %s12, 1
    %s20 = ssub.s32 %s12, %s19
    %p21 = scmp.eq.s32.totalorder %s20, 0
    %s23 = sadd.s32 %s22, 1
    %s24 = scalar_select %p21, %s22, %s23
    %p27 = pneg %p21
    %p28 = scmp.eq.s32.totalorder %s12, 1
    %p29 = por %p27, %p28
    %p30 = scmp.ne.s32.totalorder %s22, %s25
    %p31 = scmp.eq.s32.totalorder %s12, 0
    %p32 = por %p30, %p31
    %p33 = scmp.ne.s32.totalorder %s22, %s25
    %p34 = scmp.eq.s32.totalorder %s17, 1
    %p35 = por %p33, %p34
    %p36 = scmp.ne.s32.totalorder %s25, %s26
    %p37 = scmp.eq.s32.totalorder %s17, 0
    %p38 = por %p36, %p37
    %p39 = scmp.ne.s32.totalorder %s25, %s26
    %p40 = scmp.eq.s32.totalorder %s18, 1
    %p41 = por %p39, %p40
    %p43 = scmp.ne.s32.totalorder %s26, %s42
    %p44 = scmp.eq.s32.totalorder %s18, 0
    %p45 = por %p43, %p44
    %s46 = ssub.s32 %s12, 1
    %p47 = scmp.gt.s32.totalorder %s46, 0
    %s48 = scalar_select %p47, %s46, 0
    %s49 = ssub.s32 %s19, 1
    %p50 = scmp.gt.s32.totalorder %s49, 0
    %s51 = scalar_select %p50, %s49, 0
    %s52 = ssub.s32 %s48, %s51
    %p53 = scmp.eq.s32.totalorder %s52, 0
    %s55 = sadd.s32 %s54, 1
    %s56 = scalar_select %p53, %s54, %s55
    %p59 = pneg %p53
    %p60 = scmp.eq.s32.totalorder %s12, 1
    %p61 = por %p59, %p60
    %p62 = scmp.ne.s32.totalorder %s54, %s57
    %p63 = scmp.eq.s32.totalorder %s12, 0
    %p64 = por %p62, %p63
    %p65 = scmp.ne.s32.totalorder %s54, %s57
    %p66 = scmp.eq.s32.totalorder %s17, 1
    %p67 = por %p65, %p66
    %p68 = scmp.ne.s32.totalorder %s57, %s58
    %p69 = scmp.eq.s32.totalorder %s17, 0
    %p70 = por %p68, %p69
    %p71 = scmp.ne.s32.totalorder %s57, %s58
    %p72 = scmp.eq.s32.totalorder %s18, 1
    %p73 = por %p71, %p72
    %p75 = scmp.ne.s32.totalorder %s58, %s74
    %p76 = scmp.eq.s32.totalorder %s18, 0
    %p77 = por %p75, %p76
    %s78 = sadd.s32 %s12, 1
    %p79 = scmp.lt.s32.totalorder %s78, 1
    %s80 = scalar_select %p79, %s78, 1
    %s81 = sadd.s32 %s19, 1
    %p82 = scmp.lt.s32.totalorder %s81, 1
    %s83 = scalar_select %p82, %s81, 1
    %s84 = ssub.s32 %s80, %s83
    %p85 = scmp.eq.s32.totalorder %s84, 0
    %s87 = sadd.s32 %s86, 1
    %s88 = scalar_select %p85, %s86, %s87
    %p91 = pneg %p85
    %p92 = scmp.eq.s32.totalorder %s12, 1
    %p93 = por %p91, %p92
    %p94 = scmp.ne.s32.totalorder %s86, %s89
    %p95 = scmp.eq.s32.totalorder %s12, 0
    %p96 = por %p94, %p95
    %p97 = scmp.ne.s32.totalorder %s86, %s89
    %p98 = scmp.eq.s32.totalorder %s17, 1
    %p99 = por %p97, %p98
    %p100 = scmp.ne.s32.totalorder %s89, %s90
    %p101 = scmp.eq.s32.totalorder %s17, 0
    %p102 = por %p100, %p101
    %p103 = scmp.ne.s32.totalorder %s89, %s90
    %p104 = scmp.eq.s32.totalorder %s18, 1
    %p105 = por %p103, %p104
    %p107 = scmp.ne.s32.totalorder %s90, %s106
    %p108 = scmp.eq.s32.totalorder %s18, 0
    %p109 = por %p107, %p108
    %s110 = ssub.s32 %s12, %s19
    %p111 = scmp.eq.s32.totalorder %s110, 0
    %s113 = sadd.s32 %s112, 1
    %s114 = scalar_select %p111, %s112, %s113
    %p117 = pneg %p111
    %p118 = scmp.eq.s32.totalorder %s12, 1
    %p119 = por %p117, %p118
    %p120 = scmp.ne.s32.totalorder %s112, %s115
    %p121 = scmp.eq.s32.totalorder %s12, 0
    %p122 = por %p120, %p121
    %p123 = scmp.ne.s32.totalorder %s112, %s115
    %p124 = scmp.eq.s32.totalorder %s17, 1
    %p125 = por %p123, %p124
    %p126 = scmp.ne.s32.totalorder %s115, %s116
    %p127 = scmp.eq.s32.totalorder %s17, 0
    %p128 = por %p126, %p127
    %p129 = scmp.ne.s32.totalorder %s115, %s116
    %p130 = scmp.eq.s32.totalorder %s18, 1
    %p131 = por %p129, %p130
    %p133 = scmp.ne.s32.totalorder %s116, %s132
    %p134 = scmp.eq.s32.totalorder %s18, 0
    %p135 = por %p133, %p134
    %s136 = ssub.s32 %s12, 1
    %p137 = scmp.gt.s32.totalorder %s136, 0
    %s138 = scalar_select %p137, %s136, 0
    %s139 = ssub.s32 %s19, 1
    %p140 = scmp.gt.s32.totalorder %s139, 0
    %s141 = scalar_select %p140, %s139, 0
    %s142 = ssub.s32 %s138, %s141
    %p143 = scmp.eq.s32.totalorder %s142, 0
    %s145 = sadd.s32 %s144, 1
    %s146 = scalar_select %p143, %s144, %s145
    %p149 = pneg %p143
    %p150 = scmp.eq.s32.totalorder %s12, 1
    %p151 = por %p149, %p150
    %p152 = scmp.ne.s32.totalorder %s144, %s147
    %p153 = scmp.eq.s32.totalorder %s12, 0
    %p154 = por %p152, %p153
    %p155 = scmp.ne.s32.totalorder %s144, %s147
    %p156 = scmp.eq.s32.totalorder %s17, 1
    %p157 = por %p155, %p156
    %p158 = scmp.ne.s32.totalorder %s147, %s148
    %p159 = scmp.eq.s32.totalorder %s17, 0
    %p160 = por %p158, %p159
    %p161 = scmp.ne.s32.totalorder %s147, %s148
    %p162 = scmp.eq.s32.totalorder %s18, 1
    %p163 = por %p161, %p162
    %p165 = scmp.ne.s32.totalorder %s148, %s164
    %p166 = scmp.eq.s32.totalorder %s18, 0
    %p167 = por %p165, %p166
    %s168 = sadd.s32 %s12, 1
    %p169 = scmp.lt.s32.totalorder %s168, 1
    %s170 = scalar_select %p169, %s168, 1
    %s171 = sadd.s32 %s19, 1
    %p172 = scmp.lt.s32.totalorder %s171, 1
    %s173 = scalar_select %p172, %s171, 1
    %s174 = ssub.s32 %s170, %s173
    %p175 = scmp.eq.s32.totalorder %s174, 0
    %s177 = sadd.s32 %s176, 1
    %s178 = scalar_select %p175, %s176, %s177
    %p181 = pneg %p175
    %p182 = scmp.eq.s32.totalorder %s12, 1
    %p183 = por %p181, %p182
    %p184 = scmp.ne.s32.totalorder %s176, %s179
    %p185 = scmp.eq.s32.totalorder %s12, 0
    %p186 = por %p184, %p185
    %p187 = scmp.ne.s32.totalorder %s176, %s179
    %p188 = scmp.eq.s32.totalorder %s17, 1
    %p189 = por %p187, %p188
    %p190 = scmp.ne.s32.totalorder %s179, %s180
    %p191 = scmp.eq.s32.totalorder %s17, 0
    %p192 = por %p190, %p191
    %p193 = scmp.ne.s32.totalorder %s179, %s180
    %p194 = scmp.eq.s32.totalorder %s18, 1
    %p195 = por %p193, %p194
    %p197 = scmp.ne.s32.totalorder %s180, %s196
    %p198 = scmp.eq.s32.totalorder %s18, 0
    %p199 = por %p197, %p198
    %s201 = sadd.s32 %s200, 1
    %p204 = scmp.eq.s32.totalorder %s12, 1
    %p205 = scmp.ne.s32.totalorder %s200, %s202
    %p206 = scmp.eq.s32.totalorder %s12, 0
    %p207 = por %p205, %p206
    %p208 = scmp.ne.s32.totalorder %s200, %s202
    %p209 = scmp.eq.s32.totalorder %s17, 1
    %p210 = por %p208, %p209
    %p211 = scmp.ne.s32.totalorder %s202, %s203
    %p212 = scmp.eq.s32.totalorder %s17, 0
    %p213 = por %p211, %p212
    %p214 = scmp.ne.s32.totalorder %s202, %s203
    %p215 = scmp.eq.s32.totalorder %s18, 1
    %p216 = por %p214, %p215
    %p218 = scmp.ne.s32.totalorder %s203, %s217
    %p219 = scmp.eq.s32.totalorder %s18, 0
    %p220 = por %p218, %p219
    %p221 = scmp.le.s32.totalorder 1, %s12
    %p222 = scmp.lt.s32.totalorder %s12, 3
    %p223 = pnand %p221, %p222
    %p224 = pneg %p223
    // Predicated region
    $region9: #{boundary_loss.1} parent=5 // pred_check
      _
    $region10: #{boundary_loss.1} parent=5 // pred_check_branch
      %226 = sbr.rel (%p223) target = $region12
    $region11: #{boundary_loss.1} parent=5 // pred_region
      %s227 = ssub.s32 %s12, 1
    $region12: #{boundary_loss.1} parent=5 // pred_fallthru
      _
    %p228 = scmp.lt.s32.totalorder %s12, 2
    // Predicated region
    $region13: #{boundary_loss.1} parent=5 // pred_check
      %p229 = pneg %p228
    $region14: #{boundary_loss.1} parent=5 // pred_check_branch
      %231 = sbr.rel (%p229) target = $region16
    $region15: #{boundary_loss.1} parent=5 // pred_region
      // Predicated region
      $region17: #{boundary_loss.1} parent=15 // pred_check
        %p232 = pneg %p32
      $region18: #{boundary_loss.1} parent=15 // pred_check_branch
        %234 = sbr.rel (%p232) target = $region20
      $region19: #{boundary_loss.1} parent=15 // pred_region
        %p235 = scmp.lt.s32.totalorder %s12, 1
        %s236 = scalar_select %p235, %s12, 1
        %s237 = smul.addr %s236, 2
        %s238 = smul.addr %s237, 8
        %s239 = scalar_lea.vmem %s0, %s238
      $region20: #{boundary_loss.1} parent=15 // pred_fallthru
        _
      // Predicated region
      $region21: #{boundary_loss.1} parent=15 // pred_check
        %p240 = pneg %p64
      $region22: #{boundary_loss.1} parent=15 // pred_check_branch
        %242 = sbr.rel (%p240) target = $region24
      $region23: #{boundary_loss.1} parent=15 // pred_region
        %s243 = ssub.s32 %s12, 1
        %p244 = scmp.gt.s32.totalorder %s243, 0
        %s245 = scalar_select %p244, %s243, 0
        %p246 = scmp.lt.s32.totalorder %s245, 1
        %s247 = scalar_select %p246, %s245, 1
        %s248 = smul.addr %s247, 2
        %s249 = smul.addr %s248, 8
        %s250 = scalar_lea.vmem %s1, %s249
        %s251 = ssub.s32 %s12, 1
        %p252 = scmp.gt.s32.totalorder %s251, 0
        %s253 = scalar_select %p252, %s251, 0
      $region24: #{boundary_loss.1} parent=15 // pred_fallthru
        _
      // Predicated region
      $region25: #{boundary_loss.1} parent=15 // pred_check
        %p254 = pneg %p96
      $region26: #{boundary_loss.1} parent=15 // pred_check_branch
        %256 = sbr.rel (%p254) target = $region28
      $region27: #{boundary_loss.1} parent=15 // pred_region
        %s257 = sadd.s32 %s12, 1
        %p258 = scmp.lt.s32.totalorder %s257, 1
        %s259 = scalar_select %p258, %s257, 1
        %p260 = scmp.lt.s32.totalorder %s259, 1
        %s261 = scalar_select %p260, %s259, 1
        %s262 = smul.addr %s261, 2
        %s263 = smul.addr %s262, 8
        %s264 = scalar_lea.vmem %s2, %s263
        %s265 = sadd.s32 %s12, 1
        %p266 = scmp.lt.s32.totalorder %s265, 1
        %s267 = scalar_select %p266, %s265, 1
      $region28: #{boundary_loss.1} parent=15 // pred_fallthru
        _
      // Predicated region
      $region29: #{boundary_loss.1} parent=15 // pred_check
        %p268 = pneg %p122
      $region30: #{boundary_loss.1} parent=15 // pred_check_branch
        %270 = sbr.rel (%p268) target = $region32
      $region31: #{boundary_loss.1} parent=15 // pred_region
        %p271 = scmp.lt.s32.totalorder %s12, 1
        %s272 = scalar_select %p271, %s12, 1
        %s273 = smul.addr %s272, 2
        %s274 = smul.addr %s273, 8
        %s275 = scalar_lea.vmem %s3, %s274
      $region32: #{boundary_loss.1} parent=15 // pred_fallthru
        _
      // Predicated region
      $region33: #{boundary_loss.1} parent=15 // pred_check
        %p276 = pneg %p154
      $region34: #{boundary_loss.1} parent=15 // pred_check_branch
        %278 = sbr.rel (%p276) target = $region36
      $region35: #{boundary_loss.1} parent=15 // pred_region
        %s279 = ssub.s32 %s12, 1
        %p280 = scmp.gt.s32.totalorder %s279, 0
        %s281 = scalar_select %p280, %s279, 0
        %p282 = scmp.lt.s32.totalorder %s281, 1
        %s283 = scalar_select %p282, %s281, 1
        %s284 = smul.addr %s283, 2
        %s285 = smul.addr %s284, 8
        %s286 = scalar_lea.vmem %s4, %s285
        %s287 = ssub.s32 %s12, 1
        %p288 = scmp.gt.s32.totalorder %s287, 0
        %s289 = scalar_select %p288, %s287, 0
      $region36: #{boundary_loss.1} parent=15 // pred_fallthru
        _
      // Predicated region
      $region37: #{boundary_loss.1} parent=15 // pred_check
        %p290 = pneg %p186
      $region38: #{boundary_loss.1} parent=15 // pred_check_branch
        %292 = sbr.rel (%p290) target = $region40
      $region39: #{boundary_loss.1} parent=15 // pred_region
        %s293 = sadd.s32 %s12, 1
        %p294 = scmp.lt.s32.totalorder %s293, 1
        %s295 = scalar_select %p294, %s293, 1
        %p296 = scmp.lt.s32.totalorder %s295, 1
        %s297 = scalar_select %p296, %s295, 1
        %s298 = smul.addr %s297, 2
        %s299 = smul.addr %s298, 8
        %s300 = scalar_lea.vmem %s5, %s299
        %s301 = sadd.s32 %s12, 1
        %p302 = scmp.lt.s32.totalorder %s301, 1
        %s303 = scalar_select %p302, %s301, 1
      $region40: #{boundary_loss.1} parent=15 // pred_fallthru
        _
    $region16: #{boundary_loss.1} parent=5 // pred_fallthru
      _
    %p304 = scmp.le.s32.totalorder 1, %s12
    %p305 = scmp.lt.s32.totalorder %s12, 3
    %p306 = pnand %p304, %p305
    %p307 = pneg %p306
    // Predicated region
    $region41: #{boundary_loss.1} parent=5 // pred_check
      _
    $region42: #{boundary_loss.1} parent=5 // pred_check_branch
      %309 = sbr.rel (%p306) target = $region44
    $region43: #{boundary_loss.1} parent=5 // pred_region
      %s310 = ssub.s32 %s12, 1
      %p311 = scmp.lt.s32.totalorder %s17, 1
      %s312 = scalar_select %p311, %s17, 1
      %s313 = smul.addr %s312, 2
      %s314 = smul.addr %s313, 8
      %s315 = scalar_lea.vmem %s0, %s314
      %p316 = pneg %p38
      %p317 = pneg %p35
      %s318 = ssub.s32 %s17, 1
      %p319 = scmp.gt.s32.totalorder %s318, 0
      %s320 = scalar_select %p319, %s318, 0
      %p321 = scmp.lt.s32.totalorder %s320, 1
      %s322 = scalar_select %p321, %s320, 1
      %s323 = smul.addr %s322, 2
      %s324 = smul.addr %s323, 8
      %s325 = scalar_lea.vmem %s1, %s324
      %p326 = pneg %p70
      %p327 = pneg %p67
      %s328 = sadd.s32 %s17, 1
      %p329 = scmp.lt.s32.totalorder %s328, 1
      %s330 = scalar_select %p329, %s328, 1
      %p331 = scmp.lt.s32.totalorder %s330, 1
      %s332 = scalar_select %p331, %s330, 1
      %s333 = smul.addr %s332, 2
      %s334 = smul.addr %s333, 8
      %s335 = scalar_lea.vmem %s2, %s334
      %p336 = pneg %p102
      %p337 = pneg %p99
      %p338 = scmp.lt.s32.totalorder %s17, 1
      %s339 = scalar_select %p338, %s17, 1
      %s340 = smul.addr %s339, 2
      %s341 = smul.addr %s340, 8
      %s342 = scalar_lea.vmem %s3, %s341
      %p343 = pneg %p128
      %p344 = pneg %p125
      %s345 = ssub.s32 %s17, 1
      %p346 = scmp.gt.s32.totalorder %s345, 0
      %s347 = scalar_select %p346, %s345, 0
      %p348 = scmp.lt.s32.totalorder %s347, 1
      %s349 = scalar_select %p348, %s347, 1
      %s350 = smul.addr %s349, 2
      %s351 = smul.addr %s350, 8
      %s352 = scalar_lea.vmem %s4, %s351
      %p353 = pneg %p160
      %p354 = pneg %p157
      %s355 = sadd.s32 %s17, 1
      %p356 = scmp.lt.s32.totalorder %s355, 1
      %s357 = scalar_select %p356, %s355, 1
      %p358 = scmp.lt.s32.totalorder %s357, 1
      %s359 = scalar_select %p358, %s357, 1
      %s360 = smul.addr %s359, 2
      %s361 = smul.addr %s360, 8
      %s362 = scalar_lea.vmem %s5, %s361
      %p363 = pneg %p192
      %p364 = pneg %p189
      %p365 = pneg %p213
      %p366 = pneg %p210
      %p367 = scmp.lt.s32.totalorder %s17, 1
      %s368 = scalar_select %p367, %s17, 1
      %s369 = smul.addr %s368, 2
      %s370 = smul.addr %s369, 8
      %s371 = scalar_lea.vmem %s0, %s370
      %s372 = ssub.s32 %s17, 1
      %p373 = scmp.gt.s32.totalorder %s372, 0
      %s374 = scalar_select %p373, %s372, 0
      %p375 = scmp.lt.s32.totalorder %s374, 1
      %s376 = scalar_select %p375, %s374, 1
      %s377 = smul.addr %s376, 2
      %s378 = smul.addr %s377, 8
      %s379 = scalar_lea.vmem %s1, %s378
      %s380 = ssub.s32 %s17, 1
      %p381 = scmp.gt.s32.totalorder %s380, 0
      %s382 = scalar_select %p381, %s380, 0
      %s383 = sadd.s32 %s17, 1
      %p384 = scmp.lt.s32.totalorder %s383, 1
      %s385 = scalar_select %p384, %s383, 1
      %p386 = scmp.lt.s32.totalorder %s385, 1
      %s387 = scalar_select %p386, %s385, 1
      %s388 = smul.addr %s387, 2
      %s389 = smul.addr %s388, 8
      %s390 = scalar_lea.vmem %s2, %s389
      %s391 = sadd.s32 %s17, 1
      %p392 = scmp.lt.s32.totalorder %s391, 1
      %s393 = scalar_select %p392, %s391, 1
      %p394 = scmp.lt.s32.totalorder %s17, 1
      %s395 = scalar_select %p394, %s17, 1
      %s396 = smul.addr %s395, 2
      %s397 = smul.addr %s396, 8
      %s398 = scalar_lea.vmem %s3, %s397
      %s399 = ssub.s32 %s17, 1
      %p400 = scmp.gt.s32.totalorder %s399, 0
      %s401 = scalar_select %p400, %s399, 0
      %p402 = scmp.lt.s32.totalorder %s401, 1
      %s403 = scalar_select %p402, %s401, 1
      %s404 = smul.addr %s403, 2
      %s405 = smul.addr %s404, 8
      %s406 = scalar_lea.vmem %s4, %s405
      %s407 = ssub.s32 %s17, 1
      %p408 = scmp.gt.s32.totalorder %s407, 0
      %s409 = scalar_select %p408, %s407, 0
      %s410 = sadd.s32 %s17, 1
      %p411 = scmp.lt.s32.totalorder %s410, 1
      %s412 = scalar_select %p411, %s410, 1
      %p413 = scmp.lt.s32.totalorder %s412, 1
      %s414 = scalar_select %p413, %s412, 1
      %s415 = smul.addr %s414, 2
      %s416 = smul.addr %s415, 8
      %s417 = scalar_lea.vmem %s5, %s416
      %s418 = sadd.s32 %s17, 1
      %p419 = scmp.lt.s32.totalorder %s418, 1
      %s420 = scalar_select %p419, %s418, 1
      %p421 = scmp.eq.s32.totalorder %s17, 0
      // Predicated region
      $region45: #{boundary_loss.1} parent=43 // pred_check
        %p422 = pneg %p421
      $region46: #{boundary_loss.1} parent=43 // pred_check_branch
        %424 = sbr.rel (%p422) target = $region48
      $region47: #{boundary_loss.1} parent=43 // pred_region
        %425 = vst [vmem:[%s6] sm:$0x3] 0.0
      $region48: #{boundary_loss.1} parent=43 // pred_fallthru
        _
      %p426 = scmp.gt.s32.totalorder %s17, 0
      %s427 = scalar_select %p426, 1, 0
      %s428 = scvt.s32.f32 %s427
      %p429 = scmp.lt.s32.totalorder %s17, 1
      %s430 = scalar_select %p429, 1, 0
      %s431 = scvt.s32.f32 %s430
      %v432 = vlaneseq
      %v433 = vand.u32 %v432, 127
      %v434 = vadd.s32 %v433, 128
      %vm435 = vcmp.lt.s32.totalorder %v433, 0
      %v436 = vsub.s32 0, %v433
      %v437 = vsel %vm435, %v436, %v433
      %v438 = vshrl.u32 %v437, 4
      %v439 = vand.u32 %v437, 15
      %v440 = vsub.s32 0, %v439
      %v441 = vsel %vm435, %v440, %v439
      %vm442 = vcmp.lt.s32.totalorder %v434, 0
      %v443 = vsub.s32 0, %v434
      %v444 = vsel %vm442, %v443, %v434
      %v445 = vshrl.u32 %v444, 4
      %v446 = vand.u32 %v444, 15
      %v447 = vsub.s32 0, %v446
      %v448 = vsel %vm442, %v447, %v446
      %vm449 = vcmp.ne.s32.totalorder %v441, 0
      %vm450 = vcmp.ne.s32.totalorder %v448, 0
      %vm451 = vcmp.lt.s32.totalorder %v441, 0
      %vm452 = vcmp.lt.s32.totalorder %v448, 0
      %vm453 = vmand %vm451, %vm449
      %vm454 = vmand %vm452, %vm450
      %v455 = vadd.s32 %v441, 16
      %v456 = vadd.s32 %v448, 16
      %v457 = vsel %vm453, %v455, %v441
      %v458 = vsel %vm454, %v456, %v448
      %vm459 = vcmp.ne.s32.totalorder %v457, 0
      %vm460 = vcmp.ne.s32.totalorder %v458, 0
      %v461 = vsel %vm459, 1, 0
      %v462 = vsel %vm460, 1, 0
      %v463 = vcvt.s32.f32 %v461
      %v464 = vcvt.s32.f32 %v462
      %vm465 = vcmp.ne.s32.totalorder %v457, 15
      %vm466 = vcmp.ne.s32.totalorder %v458, 15
      %v467 = vsel %vm465, 1, 0
      %v468 = vsel %vm466, 1, 0
      %v469 = vcvt.s32.f32 %v467
      %v470 = vcvt.s32.f32 %v468
      %vm471 = vcmp.ge.s32.totalorder %v433, 16
      %vm472 = vcmp.ge.s32.totalorder %v434, 16
      %v473 = vsel %vm471, 1, 0
      %v474 = vsel %vm472, 1, 0
      %v475 = vcvt.s32.f32 %v473
      %v476 = vcvt.s32.f32 %v474
      %vm477 = vcmp.lt.s32.totalorder %v433, 240
      %vm478 = vcmp.lt.s32.totalorder %v434, 240
      %v479 = vsel %vm477, 1, 0
      %v480 = vsel %vm478, 1, 0
      %v481 = vcvt.s32.f32 %v479
      %v482 = vcvt.s32.f32 %v480
      %v483 = vlaneseq
      %v484 = vshrl.u32 %v483, 7
      %vm485 = vcmp.eq.s32.totalorder %v484, 0
      %vm486 = vcmp.eq.s32.totalorder %v484, 7
      %v487 = vld [vmem:[%s371] sm:$0xff]
      %v488 = vld [vmem:[%s371 + $0x8] sm:$0xff]
      %v489 = vxor.u32 %v487, 2147483648
      %v490 = vxor.u32 %v488, 2147483648
      %v491 = vmul.f32 %v489, 1.442695
      %v492 = vpow.pop %v491
      %v493 = vmul.f32 %v490, 1.442695
      %v494 = vpow.pop %v493
      %v495 = vadd.f32 %v492, 1.0
      %v496 = vadd.f32 %v494, 1.0
      %v497 = vrcp.pop %v495
      %v498 = vmul.f32 1.0, %v497
      %v499 = vrcp.pop %v496
      %v500 = vmul.f32 1.0, %v499
      %s501 = scalar_lea.vmem %s379, 7
      %v502 = vld [vmem:[%s501] ss:$8 sm:$0x3]
      %v503 = vxor.u32 %v502, 2147483648
      %v504 = vmul.f32 %v503, 1.442695
      %v505 = vpow.pop %v504
      %v506 = vadd.f32 %v505, 1.0
      %v507 = vrcp.pop %v506
      %v508 = vmul.f32 1.0, %v507
      %v509 = vstv %s428
      %v510 = vmul.f32 %v508, %v509
      %v511 = vld [vmem:[%s390] ss:$8 sm:$0x3]
      %v512 = vxor.u32 %v511, 2147483648
      %v513 = vmul.f32 %v512, 1.442695
      %v514 = vpow.pop %v513
      %v515 = vadd.f32 %v514, 1.0
      %v516 = vrcp.pop %v515
      %v517 = vmul.f32 1.0, %v516
      %v518 = vstv %s431
      %v519 = vmul.f32 %v517, %v518
      %520 = vrot.lane.b32.xlu0 %v498, 127
      %v521 = vpop.permute.xlu0 %520
      %522 = vrot.lane.b32.xlu0 %v500, 127
      %v523 = vpop.permute.xlu0 %522
      %vm524 = vcmp.lt.s32.totalorder %v433, 127
      %v525 = vsel %vm524, %v521, %v523
      %v526 = vsel %vm524, %v523, %v521
      %v527 = vmul.f32 %v525, %v469
      %v528 = vmul.f32 %v526, %v470
      %529 = vrot.lane.b32.xlu0 %v498, 1
      %v530 = vpop.permute.xlu0 %529
      %531 = vrot.lane.b32.xlu0 %v500, 1
      %v532 = vpop.permute.xlu0 %531
      %vm533 = vcmp.lt.s32.totalorder %v433, 1
      %v534 = vsel %vm533, %v530, %v532
      %v535 = vsel %vm533, %v532, %v530
      %v536 = vmul.f32 %v535, %v463
      %v537 = vmul.f32 %v534, %v464
      %v538 = vsub.f32 %v527, %v536
      %v539 = vsub.f32 %v528, %v537
      %540 = vrot.lane.b32.xlu0 %v498, 112
      %v541 = vpop.permute.xlu0 %540
      %542 = vrot.lane.b32.xlu0 %v500, 112
      %v543 = vpop.permute.xlu0 %542
      %vm544 = vcmp.lt.s32.totalorder %v433, 112
      %v545 = vsel %vm544, %v541, %v543
      %v546 = vsel %vm544, %v543, %v541
      %v547 = vmul.f32 %v545, %v481
      %v548 = vmul.f32 %v546, %v482
      %549 = vrot.lane.b32.xlu0 %v498, 16
      %v550 = vpop.permute.xlu0 %549
      %551 = vrot.lane.b32.xlu0 %v500, 16
      %v552 = vpop.permute.xlu0 %551
      %vm553 = vcmp.lt.s32.totalorder %v433, 16
      %v554 = vsel %vm553, %v550, %v552
      %v555 = vsel %vm553, %v552, %v550
      %v556 = vmul.f32 %v555, %v475
      %v557 = vmul.f32 %v554, %v476
      %v558 = vsub.f32 %v547, %v556
      %v559 = vsub.f32 %v548, %v557
      %v560 = vrot.slane %v498, 1
      %v561 = vrot.slane %v500, 1
      %v562 = vsel %vm486, 1, 0
      %vm563 = vcmp.eq.s32.totalorder %v562, 1
      %v565 = vlaneseq
      %v566 = vshrl.u32 %v565, 7
      %v567 = vsub.s32 0, %v566
      %v568 = vrot.slane %v519, %v567
      %v569 = vlaneseq
      %v570 = vshrl.u32 %v569, 7
      %v571 = vsub.s32 1, %v570
      %v572 = vrot.slane %v519, %v571
      %v575 = vsel %vm563, %v568, %v560
      %v576 = vsel %vm563, %v572, %v561
      %v577 = vrot.slane %v498, 7
      %v578 = vrot.slane %v500, 7
      %v579 = vsel %vm485, 1, 0
      %vm580 = vcmp.eq.s32.totalorder %v579, 1
      %v582 = vlaneseq
      %v583 = vshrl.u32 %v582, 7
      %v584 = vsub.s32 0, %v583
      %v585 = vrot.slane %v510, %v584
      %v586 = vlaneseq
      %v587 = vshrl.u32 %v586, 7
      %v588 = vsub.s32 1, %v587
      %v589 = vrot.slane %v510, %v588
      %v592 = vsel %vm580, %v585, %v577
      %v593 = vsel %vm580, %v589, %v578
      %v594 = vsub.f32 %v575, %v592
      %v595 = vsub.f32 %v576, %v593
      %vm596 = vcmp.ne.f32.partialorder %v538, 0.0
      %vm597 = vcmp.ne.f32.partialorder %v539, 0.0
      %vm598 = vcmp.ne.f32.partialorder %v558, 0.0
      %vm599 = vcmp.ne.f32.partialorder %v559, 0.0
      %vm600 = vmor %vm596, %vm598
      %vm601 = vmor %vm597, %vm599
      %vm602 = vcmp.ne.f32.partialorder %v594, 0.0
      %vm603 = vcmp.ne.f32.partialorder %v595, 0.0
      %vm604 = vmor %vm600, %vm602
      %vm605 = vmor %vm601, %vm603
      %v606 = vsel %vm604, 1, 0
      %v607 = vsel %vm605, 1, 0
      %v608 = vcvt.s32.f32 %v606
      %v609 = vcvt.s32.f32 %v607
      %v610 = vld [vmem:[%s398] sm:$0xff]
      %v611 = vld [vmem:[%s398 + $0x8] sm:$0xff]
      %s612 = scalar_lea.vmem %s406, 7
      %v613 = vld [vmem:[%s612] ss:$8 sm:$0x3]
      %v614 = vmul.f32 %v613, %v509
      %v615 = vld [vmem:[%s417] ss:$8 sm:$0x3]
      %v616 = vmul.f32 %v615, %v518
      %617 = vrot.lane.b32.xlu0 %v610, 127
      %v618 = vpop.permute.xlu0 %617
      %619 = vrot.lane.b32.xlu0 %v611, 127
      %v620 = vpop.permute.xlu0 %619
      %v621 = vsel %vm524, %v618, %v620
      %v622 = vsel %vm524, %v620, %v618
      %v623 = vmul.f32 %v621, %v469
      %v624 = vmul.f32 %v622, %v470
      %625 = vrot.lane.b32.xlu0 %v610, 1
      %v626 = vpop.permute.xlu0 %625
      %627 = vrot.lane.b32.xlu0 %v611, 1
      %v628 = vpop.permute.xlu0 %627
      %v629 = vsel %vm533, %v626, %v628
      %v630 = vsel %vm533, %v628, %v626
      %v631 = vmul.f32 %v630, %v463
      %v632 = vmul.f32 %v629, %v464
      %v633 = vsub.f32 %v623, %v631
      %v634 = vsub.f32 %v624, %v632
      %635 = vrot.lane.b32.xlu0 %v610, 112
      %v636 = vpop.permute.xlu0 %635
      %637 = vrot.lane.b32.xlu0 %v611, 112
      %v638 = vpop.permute.xlu0 %637
      %v639 = vsel %vm544, %v636, %v638
      %v640 = vsel %vm544, %v638, %v636
      %v641 = vmul.f32 %v639, %v481
      %v642 = vmul.f32 %v640, %v482
      %643 = vrot.lane.b32.xlu0 %v610, 16
      %v644 = vpop.permute.xlu0 %643
      %645 = vrot.lane.b32.xlu0 %v611, 16
      %v646 = vpop.permute.xlu0 %645
      %v647 = vsel %vm553, %v644, %v646
      %v648 = vsel %vm553, %v646, %v644
      %v649 = vmul.f32 %v648, %v475
      %v650 = vmul.f32 %v647, %v476
      %v651 = vsub.f32 %v641, %v649
      %v652 = vsub.f32 %v642, %v650
      %v653 = vrot.slane %v610, 1
      %v654 = vrot.slane %v611, 1
      %v656 = vlaneseq
      %v657 = vshrl.u32 %v656, 7
      %v658 = vsub.s32 0, %v657
      %v659 = vrot.slane %v616, %v658
      %v660 = vlaneseq
      %v661 = vshrl.u32 %v660, 7
      %v662 = vsub.s32 1, %v661
      %v663 = vrot.slane %v616, %v662
      %v666 = vsel %vm563, %v659, %v653
      %v667 = vsel %vm563, %v663, %v654
      %v668 = vrot.slane %v610, 7
      %v669 = vrot.slane %v611, 7
      %v671 = vlaneseq
      %v672 = vshrl.u32 %v671, 7
      %v673 = vsub.s32 0, %v672
      %v674 = vrot.slane %v614, %v673
      %v675 = vlaneseq
      %v676 = vshrl.u32 %v675, 7
      %v677 = vsub.s32 1, %v676
      %v678 = vrot.slane %v614, %v677
      %v681 = vsel %vm580, %v674, %v668
      %v682 = vsel %vm580, %v678, %v669
      %v683 = vsub.f32 %v666, %v681
      %v684 = vsub.f32 %v667, %v682
      %vm685 = vcmp.ne.f32.partialorder %v633, 0.0
      %vm686 = vcmp.ne.f32.partialorder %v634, 0.0
      %vm687 = vcmp.ne.f32.partialorder %v651, 0.0
      %vm688 = vcmp.ne.f32.partialorder %v652, 0.0
      %vm689 = vmor %vm685, %vm687
      %vm690 = vmor %vm686, %vm688
      %vm691 = vcmp.ne.f32.partialorder %v683, 0.0
      %vm692 = vcmp.ne.f32.partialorder %v684, 0.0
      %vm693 = vmor %vm689, %vm691
      %vm694 = vmor %vm690, %vm692
      %v695 = vsel %vm693, 1, 0
      %v696 = vsel %vm694, 1, 0
      %v697 = vcvt.s32.f32 %v695
      %v698 = vcvt.s32.f32 %v696
      %v699 = vmul.f32 %v608, %v697
      %v700 = vmul.f32 %v609, %v698
      %v701 = vadd.f32 %v699, %v700
      %702 = vadd.xlane.f32.xlu0 %v701
      %v703 = vpop.xlane.xlu0 %702
      %v704 = vrot.slane %v703, 4
      %v705 = vadd.f32 %v703, %v704
      %v706 = vrot.slane %v705, 2
      %v707 = vadd.f32 %v705, %v706
      %v708 = vrot.slane %v707, 1
      %v709 = vadd.f32 %v707, %v708
      %s710 = vtos %v709
      %v711 = vadd.f32 %v608, %v697
      %v712 = vadd.f32 %v609, %v698
      %v713 = vadd.f32 %v711, %v712
      %714 = vadd.xlane.f32.xlu0 %v713
      %v715 = vpop.xlane.xlu0 %714
      %v716 = vrot.slane %v715, 4
      %v717 = vadd.f32 %v715, %v716
      %v718 = vrot.slane %v717, 2
      %v719 = vadd.f32 %v717, %v718
      %v720 = vrot.slane %v719, 1
      %v721 = vadd.f32 %v719, %v720
      %s722 = vtos %v721
      %v723 = vld [vmem:[%s6] sm:$0x3]
      %v724 = vstv %s710
      %v725 = vstv %s722
      %v726 = vsel %vm485, %v724, %v725
      %v727 = vadd.f32 %v723, %v726
      %728 = vst [vmem:[%s6] sm:$0x3] %v727
      // Predicated region
      $region49: #{boundary_loss.1} parent=43 // pred_check
        %p729 = pneg %p210
      $region50: #{boundary_loss.1} parent=43 // pred_check_branch
        %731 = sbr.rel (%p729) target = $region52
      $region51: #{boundary_loss.1} parent=43 // pred_region
        _
      $region52: #{boundary_loss.1} parent=43 // pred_fallthru
        _
      // Predicated region
      $region53: #{boundary_loss.1} parent=43 // pred_check
        %p732 = pneg %p210
      $region54: #{boundary_loss.1} parent=43 // pred_check_branch
        %734 = sbr.rel (%p732) target = $region56
      $region55: #{boundary_loss.1} parent=43 // pred_region
        _
      $region56: #{boundary_loss.1} parent=43 // pred_fallthru
        _
    $region44: #{boundary_loss.1} parent=5 // pred_fallthru
      _
    %p735 = scmp.le.s32.totalorder 2, %s12
    // Predicated region
    $region57: #{boundary_loss.1} parent=5 // pred_check
      %p736 = pneg %p735
    $region58: #{boundary_loss.1} parent=5 // pred_check_branch
      %738 = sbr.rel (%p736) target = $region60
    $region59: #{boundary_loss.1} parent=5 // pred_region
      %s739 = ssub.s32 %s12, 2
    $region60: #{boundary_loss.1} parent=5 // pred_fallthru
      _
  $region6: #{boundary_loss.1} parent=0 // loop_footer
    %s16 = sadd.s32 1, %s12
  $region7: #{boundary_loss.1} parent=0 // loop_footer_branch
    %11 = sbr.rel target = $region3
  $region8: #{boundary_loss.1} parent=0 // loop_exit
    _

</llo_original>
